<compile_context>
chip_gen: v7x
topology: tpu7x:2x2x1
jax: 0.10.0
libtpu: 0.0.40
codegen_flags: <defaults>
</compile_context>

<pallas_src>
import math
from functools import partial

import numpy as np
import jax
import jax.numpy as jnp
from jax.experimental import pallas as pl
from jax.experimental.pallas import tpu as pltpu


# ----------------------------------------------------------------------------
# Deterministic "parameters" (mirror torchaudio.MelSpectrogram), built in f64
# ----------------------------------------------------------------------------
def _round_up(x, m):
    return (x + m - 1) // m * m


def _hz_to_mel(f):
    # HTK mel scale (torchaudio default mel_scale="htk")
    return 2595.0 * np.log10(1.0 + f / 700.0)


def _melscale_fbanks_np(n_freqs, f_min, f_max, n_mels, sr):
    """torchaudio.functional.melscale_fbanks (norm=None, mel_scale='htk')."""
    all_freqs = np.linspace(0.0, sr / 2.0, n_freqs)                  # (n_freqs,)
    m_min, m_max = _hz_to_mel(f_min), _hz_to_mel(f_max)
    m_pts = np.linspace(m_min, m_max, n_mels + 2)
    f_pts = 700.0 * (10.0 ** (m_pts / 2595.0) - 1.0)                 # (n_mels+2,)
    f_diff = f_pts[1:] - f_pts[:-1]                                  # (n_mels+1,)
    slopes = f_pts[None, :] - all_freqs[:, None]                     # (n_freqs, n_mels+2)
    down = -slopes[:, :-2] / f_diff[:-1]
    up = slopes[:, 2:] / f_diff[1:]
    return np.maximum(0.0, np.minimum(down, up))                     # (n_freqs, n_mels)


def _hann_window_np(n_fft):
    # torch.hann_window(n_fft) is periodic by default
    n = np.arange(n_fft, dtype=np.float64)
    return 0.5 * (1.0 - np.cos(2.0 * np.pi * n / n_fft))


def _windowed_dft_np(n_fft, n_freqs):
    """Hann window folded into the real-DFT matrices: (win*cos, -win*sin)."""
    n = np.arange(n_fft, dtype=np.float64)[:, None]
    k = np.arange(n_freqs, dtype=np.float64)[None, :]
    ang = 2.0 * np.pi * n * k / n_fft
    win = _hann_window_np(n_fft)[:, None]
    return win * np.cos(ang), -win * np.sin(ang)


def _build_constants(n_fft, n_freqs, n_mels, sr, k_rows, n_freqs_pad, n_mels_pad):
    """Fused [win*cos | -win*sin] DFT weight (zero-padded in K to k_rows, bf16)
    and zero-padded mel filterbank (f32)."""
    cos_w, sin_w = _windowed_dft_np(n_fft, n_freqs)
    dft = np.zeros((k_rows, 2 * n_freqs_pad), dtype=np.float64)
    dft[:n_fft, :n_freqs] = cos_w
    dft[:n_fft, n_freqs_pad:n_freqs_pad + n_freqs] = sin_w

    fb = np.zeros((n_freqs_pad, n_mels_pad), dtype=np.float64)
    fb[:n_freqs, :n_mels] = _melscale_fbanks_np(n_freqs, 0.0, sr / 2.0, n_mels, sr)

    return (jnp.asarray(dft, dtype=jnp.bfloat16),
            jnp.asarray(fb, dtype=jnp.float32))


# ----------------------------------------------------------------------------
# Pallas kernel: in-VMEM framing -> windowed DFT -> power -> mel -> log -> T
# ----------------------------------------------------------------------------
def _mel_spec_kernel(rows_ref, ext_ref, dft_ref, fb_ref, out_ref, win_ref, *,
                     n_freqs_pad, n_mels, norm_audio, eps):
    tile_t = rows_ref.shape[1]          # frames per tile
    hop = rows_ref.shape[2]             # samples per row
    ext_rows = ext_ref.shape[1]
    n_slabs = dft_ref.shape[0] // hop   # ceil(n_fft / hop)

    # contiguous sample window for this tile of frames (tile_t + ext_rows rows)
    win_ref[pl.ds(0, tile_t), :] = rows_ref[0]
    win_ref[pl.ds(tile_t, ext_rows), :] = ext_ref[0]

    # Hop-strided framing folded into the DFT matmul: frame t covers rows
    # t .. t+n_slabs-1, so ri = sum_s rows[t+s] @ dft[s*hop:(s+1)*hop].
    # dft rows beyond n_fft are zero, so the partial last slab is handled for free.
    ri = None
    for s in range(n_slabs):
        slab = win_ref[pl.ds(s, tile_t), :].astype(jnp.bfloat16)       # (tile_t, hop)
        contrib = jnp.dot(slab, dft_ref[pl.ds(s * hop, hop), :],
                          preferred_element_type=jnp.float32)          # (tile_t, 2*Fp)
        ri = contrib if ri is None else ri + contrib

    real = ri[:, :n_freqs_pad]
    imag = ri[:, n_freqs_pad:]
    power = real * real + imag * imag                                  # f32 (power=2.0)

    # mel projection kept in f32 (cheap: ~10% of FLOPs) for accuracy
    mel = jnp.dot(power, fb_ref[...], preferred_element_type=jnp.float32)
    log_spec = jnp.log(mel + eps)                                      # (tile_t, n_mels_pad)

    if norm_audio:
        # torch: log_spec /= log_spec.sum over the mel axis (real columns only)
        denom = jnp.sum(log_spec[:, :n_mels], axis=-1, keepdims=True)
        log_spec = log_spec * pl.reciprocal(denom, approx=True)

    # in-kernel transpose -> (n_mels, tile_t); only the real mel rows are stored
    out_ref[0] = jnp.transpose(log_spec)[:n_mels, :]


def mel_spec(waveform, *, windows_size=0.025, sr=16000, n_mels=64,
             norm_audio=False, hop=0.01, tile_t_max=512):
    """JAX/Pallas equivalent of MelSpec.forward. waveform: (B, L) -> (B, n_mels, T)."""
    waveform = waveform.astype(jnp.float32)
    B, L = waveform.shape
    hop_length = int(sr * hop)
    n_fft = int(sr * windows_size)
    n_freqs = n_fft // 2 + 1
    n_frames = 1 + L // hop_length

    # slab decomposition of one frame into hop-wide rows
    n_slabs = -(-n_fft // hop_length)
    ext_rows = 8
    while ext_rows < n_slabs - 1:       # overlap rows needed beyond a tile
        ext_rows *= 2
    assert ext_rows <= 128, "window far larger than hop is not supported"

    n_freqs_pad = _round_up(n_freqs, 128)        # 201 -> 256
    n_mels_pad = _round_up(n_mels, 128)          # 64  -> 128

    tile_t = min(_round_up(tile_t_max, 128), _round_up(n_frames, 128))
    n_tiles = -(-n_frames // tile_t)
    n_frames_pad = n_tiles * tile_t
    blocks_per_tile = tile_t // ext_rows

    # --- center=True STFT framing: reflect pad, then zero pad + reshape into
    #     hop-wide rows; no gather, no 2.5x frame expansion in HBM ------------
    pad = n_fft // 2
    padded = jnp.pad(waveform, ((0, 0), (pad, pad)), mode="reflect")
    n_rows = max(n_frames_pad + ext_rows, -(-(L + 2 * pad) // hop_length))
    total = n_rows * hop_length
    padded = jnp.pad(padded, ((0, 0), (0, total - (L + 2 * pad))))
    rows = padded.reshape(B, n_rows, hop_length)

    dft, fb = _build_constants(n_fft, n_freqs, n_mels, sr,
                               n_slabs * hop_length, n_freqs_pad, n_mels_pad)

    kernel = partial(_mel_spec_kernel, n_freqs_pad=n_freqs_pad,
                     n_mels=n_mels, norm_audio=norm_audio, eps=1e-8)

    flops = 2 * B * n_frames_pad * (n_slabs * hop_length * 2 * n_freqs_pad
                                    + n_freqs_pad * n_mels_pad)
    bytes_accessed = int(rows.size * 4 + dft.size * 2 + fb.size * 4
                         + B * n_mels * n_frames_pad * 4)

    out = pl.pallas_call(
        kernel,
        out_shape=jax.ShapeDtypeStruct((B, n_mels, n_frames_pad), jnp.float32),
        grid=(B, n_tiles),
        in_specs=[
            # main tile of hop-wide rows
            pl.BlockSpec((1, tile_t, hop_length), lambda b, i: (b, i, 0)),
            # small overlap block just past the tile (same array, second operand)
            pl.BlockSpec((1, ext_rows, hop_length),
                         lambda b, i: (b, (i + 1) * blocks_per_tile, 0)),
            # resident constants
            pl.BlockSpec((n_slabs * hop_length, 2 * n_freqs_pad), lambda b, i: (0, 0)),
            pl.BlockSpec((n_freqs_pad, n_mels_pad), lambda b, i: (0, 0)),
        ],
        out_specs=pl.BlockSpec((1, n_mels, tile_t), lambda b, i: (b, 0, i)),
        scratch_shapes=[pltpu.VMEM((tile_t + ext_rows, hop_length), jnp.float32)],
        compiler_params=pltpu.CompilerParams(
            dimension_semantics=("parallel", "parallel")),
        cost_estimate=pl.CostEstimate(
            flops=int(flops),
            transcendentals=int(B * n_frames_pad * n_mels_pad),
            bytes_accessed=bytes_accessed),
    )(rows, rows, dft, fb)

    # drop the frame padding; layout is already (B, n_mels, T)
    return out[:, :, :n_frames]


# ----------------------------------------------------------------------------
# Plain-JAX f32 reference (same math) for a sanity check
# ----------------------------------------------------------------------------
def mel_spec_ref(waveform, *, windows_size=0.025, sr=16000, n_mels=64, hop=0.01):
    waveform = waveform.astype(jnp.float32)
    B, L = waveform.shape
    hop_length = int(sr * hop)
    n_fft = int(sr * windows_size)
    n_freqs = n_fft // 2 + 1
    n_frames = 1 + L // hop_length
    pad = n_fft // 2
    padded = jnp.pad(waveform, ((0, 0), (pad, pad)), mode="reflect")
    idx = jnp.arange(n_frames)[:, None] * hop_length + jnp.arange(n_fft)[None, :]
    frames = padded[:, idx]                                        # (B, T, n_fft)
    cos_w, sin_w = _windowed_dft_np(n_fft, n_freqs)
    cos_w = jnp.asarray(cos_w, jnp.float32)
    sin_w = jnp.asarray(sin_w, jnp.float32)
    hi = jax.lax.Precision.HIGHEST
    real = jnp.einsum("btn,nf->btf", frames, cos_w, precision=hi)
    imag = jnp.einsum("btn,nf->btf", frames, sin_w, precision=hi)
    power = real * real + imag * imag
    fb = jnp.asarray(_melscale_fbanks_np(n_freqs, 0.0, sr / 2.0, n_mels, sr),
                     jnp.float32)
    mel = jnp.einsum("btf,fm->btm", power, fb, precision=hi)       # (B, T, n_mels)
    return jnp.transpose(mel, (0, 2, 1))                           # (B, n_mels, T)


if __name__ == "__main__":
    key = jax.random.PRNGKey(0)
    B = 2
    sr = 16000
    length = 4000          # small sequence; n_fft=400, hop=160 -> 26 frames
    n_mels = 64

    waveform = jax.random.normal(key, (B, length), dtype=jnp.float32)

    log_spec = mel_spec(waveform, windows_size=0.025, sr=sr,
                        n_mels=n_mels, norm_audio=False, hop=0.01)
    log_spec = jax.block_until_ready(log_spec)

    n_frames = 1 + length // int(sr * 0.01)
    assert log_spec.shape == (B, n_mels, n_frames)
    assert log_spec.shape[-2] == n_mels

    # sanity check in the power domain (exp undoes the in-kernel log);
    # tolerances account for the bf16 MXU DFT matmul with f32 accumulation.
    ref_mel = mel_spec_ref(waveform, windows_size=0.025, sr=sr,
                           n_mels=n_mels, hop=0.01)
    got_mel = jnp.exp(log_spec) - 1e-8
    assert jnp.allclose(got_mel, ref_mel, rtol=5e-2, atol=1e-1), "mismatch vs reference"

    print("KERNEL_OK")
</pallas_src>

<mosaic_0001>
module attributes {stable_mosaic.version = 11 : i64} {
  func.func @_mel_spec_kernel(%arg0: i32, %arg1: i32, %arg2: memref<1x128x160xf32, #tpu.memory_space<vmem>>, %arg3: memref<1x8x160xf32, #tpu.memory_space<vmem>>, %arg4: memref<480x512xbf16, #tpu.memory_space<vmem>>, %arg5: memref<256x128xf32, #tpu.memory_space<vmem>>, %arg6: memref<1x64x128xf32, #tpu.memory_space<vmem>>, %arg7: memref<136x160xf32, #tpu.memory_space<vmem>>) attributes {dimension_semantics = [#tpu.dimension_semantics<parallel>, #tpu.dimension_semantics<parallel>], iteration_bounds = array<i64: 2, 1>, scalar_prefetch = 0 : i64, scratch_operands = 1 : i64, tpu.core_type = #tpu.core_type<tc>, window_params = [{transform_indices = @transform_0, window_bounds = array<i64: 1, 128, 160>}, {transform_indices = @transform_1, window_bounds = array<i64: 1, 8, 160>}, {pipeline_mode = #tpu.pipeline_mode<synchronous>, transform_indices = @transform_2, window_bounds = array<i64: 480, 512>}, {pipeline_mode = #tpu.pipeline_mode<synchronous>, transform_indices = @transform_3, window_bounds = array<i64: 256, 128>}, {transform_indices = @transform_4, window_bounds = array<i64: 1, 64, 128>}]} {
    %c0 = arith.constant 0 : index
    %c0_0 = arith.constant 0 : index
    %c0_1 = arith.constant 0 : index
    %0 = vector.load %arg2[%c0, %c0_0, %c0_1] : memref<1x128x160xf32, #tpu.memory_space<vmem>>, vector<1x128x160xf32>
    %1 = vector.shape_cast %0 : vector<1x128x160xf32> to vector<128x160xf32>
    %c0_2 = arith.constant 0 : index
    %c0_3 = arith.constant 0 : index
    %2 = vector.load %arg7[%c0_2, %c0_3] : memref<136x160xf32, #tpu.memory_space<vmem>>, vector<128x160xf32>
    tpu.vector_store %arg7[%c0_2, %c0_3], %1 {strides = array<i32>} : memref<136x160xf32, #tpu.memory_space<vmem>>, vector<128x160xf32>,
    %c0_4 = arith.constant 0 : index
    %c0_5 = arith.constant 0 : index
    %c0_6 = arith.constant 0 : index
    %3 = vector.load %arg3[%c0_4, %c0_5, %c0_6] : memref<1x8x160xf32, #tpu.memory_space<vmem>>, vector<1x8x160xf32>
    %4 = vector.shape_cast %3 : vector<1x8x160xf32> to vector<8x160xf32>
    %c128 = arith.constant 128 : index
    %c0_7 = arith.constant 0 : index
    %5 = vector.load %arg7[%c128, %c0_7] : memref<136x160xf32, #tpu.memory_space<vmem>>, vector<8x160xf32>
    tpu.vector_store %arg7[%c128, %c0_7], %4 {strides = array<i32>} : memref<136x160xf32, #tpu.memory_space<vmem>>, vector<8x160xf32>,
    %c0_8 = arith.constant 0 : index
    %c0_9 = arith.constant 0 : index
    %6 = vector.load %arg7[%c0_8, %c0_9] : memref<136x160xf32, #tpu.memory_space<vmem>>, vector<128x160xf32>
    %7 = arith.truncf %6 : vector<128x160xf32> to vector<128x160xbf16>
    %c0_10 = arith.constant 0 : index
    %c0_11 = arith.constant 0 : index
    %8 = vector.load %arg4[%c0_10, %c0_11] : memref<480x512xbf16, #tpu.memory_space<vmem>>, vector<160x512xbf16>
    %cst = arith.constant dense<0.000000e+00> : vector<128x512xf32>
    %9 = tpu.matmul %7, %8, %cst {dimension_numbers = #tpu.dot_dimension_numbers<[1], [0], [0], [1], [0, 0, 1, 1], [], []>} : vector<128x160xbf16>, vector<160x512xbf16>, vector<128x512xf32> -> vector<128x512xf32>
    %c1 = arith.constant 1 : index
    %c0_12 = arith.constant 0 : index
    %10 = vector.load %arg7[%c1, %c0_12] : memref<136x160xf32, #tpu.memory_space<vmem>>, vector<128x160xf32>
    %11 = arith.truncf %10 : vector<128x160xf32> to vector<128x160xbf16>
    %c160 = arith.constant 160 : index
    %c0_13 = arith.constant 0 : index
    %12 = vector.load %arg4[%c160, %c0_13] : memref<480x512xbf16, #tpu.memory_space<vmem>>, vector<160x512xbf16>
    %cst_14 = arith.constant dense<0.000000e+00> : vector<128x512xf32>
    %13 = tpu.matmul %11, %12, %cst_14 {dimension_numbers = #tpu.dot_dimension_numbers<[1], [0], [0], [1], [0, 0, 1, 1], [], []>} : vector<128x160xbf16>, vector<160x512xbf16>, vector<128x512xf32> -> vector<128x512xf32>
    %14 = arith.addf %9, %13 : vector<128x512xf32>
    %c2 = arith.constant 2 : index
    %c0_15 = arith.constant 0 : index
    %15 = vector.load %arg7[%c2, %c0_15] : memref<136x160xf32, #tpu.memory_space<vmem>>, vector<128x160xf32>
    %16 = arith.truncf %15 : vector<128x160xf32> to vector<128x160xbf16>
    %c320 = arith.constant 320 : index
    %c0_16 = arith.constant 0 : index
    %17 = vector.load %arg4[%c320, %c0_16] : memref<480x512xbf16, #tpu.memory_space<vmem>>, vector<160x512xbf16>
    %cst_17 = arith.constant dense<0.000000e+00> : vector<128x512xf32>
    %18 = tpu.matmul %16, %17, %cst_17 {dimension_numbers = #tpu.dot_dimension_numbers<[1], [0], [0], [1], [0, 0, 1, 1], [], []>} : vector<128x160xbf16>, vector<160x512xbf16>, vector<128x512xf32> -> vector<128x512xf32>
    %19 = arith.addf %14, %18 : vector<128x512xf32>
    %20 = vector.extract_strided_slice %19 {offsets = [0, 0], sizes = [128, 256], strides = [1, 1]} : vector<128x512xf32> to vector<128x256xf32>
    %21 = vector.extract_strided_slice %19 {offsets = [0, 256], sizes = [128, 256], strides = [1, 1]} : vector<128x512xf32> to vector<128x256xf32>
    %22 = arith.mulf %20, %20 : vector<128x256xf32>
    %23 = arith.mulf %21, %21 : vector<128x256xf32>
    %24 = arith.addf %22, %23 : vector<128x256xf32>
    %c0_18 = arith.constant 0 : index
    %c0_19 = arith.constant 0 : index
    %25 = vector.load %arg5[%c0_18, %c0_19] : memref<256x128xf32, #tpu.memory_space<vmem>>, vector<256x128xf32>
    %cst_20 = arith.constant dense<0.000000e+00> : vector<128x128xf32>
    %26 = tpu.matmul %24, %25, %cst_20 {dimension_numbers = #tpu.dot_dimension_numbers<[1], [0], [0], [1], [0, 0, 1, 1], [], []>} : vector<128x256xf32>, vector<256x128xf32>, vector<128x128xf32> -> vector<128x128xf32>
    %cst_21 = arith.constant 9.99999993E-9 : f32
    %27 = vector.broadcast %cst_21 : f32 to vector<128x128xf32>
    %28 = arith.addf %26, %27 : vector<128x128xf32>
    %29 = math.log %28 : vector<128x128xf32>
    %30 = tpu.transpose %29, [1, 0] : vector<128x128xf32> -> vector<128x128xf32>
    %31 = vector.extract_strided_slice %30 {offsets = [0, 0], sizes = [64, 128], strides = [1, 1]} : vector<128x128xf32> to vector<64x128xf32>
    %c0_22 = arith.constant 0 : index
    %c0_23 = arith.constant 0 : index
    %c0_24 = arith.constant 0 : index
    %32 = vector.load %arg6[%c0_22, %c0_23, %c0_24] : memref<1x64x128xf32, #tpu.memory_space<vmem>>, vector<1x64x128xf32>
    %33 = vector.shape_cast %32 : vector<1x64x128xf32> to vector<64x128xf32>
    %34 = vector.shape_cast %31 : vector<64x128xf32> to vector<1x64x128xf32>
    tpu.vector_store %arg6[%c0_22, %c0_23, %c0_24], %34 {strides = array<i32>} : memref<1x64x128xf32, #tpu.memory_space<vmem>>, vector<1x64x128xf32>,
    return
  }
  func.func @transform_0(%arg0: i32, %arg1: i32) -> (i32, i32, i32) {
    %c0_i32 = arith.constant 0 : i32
    %c0_i32_0 = arith.constant 0 : i32
    return %arg0, %arg1, %c0_i32 : i32, i32, i32
  }
  func.func @transform_1(%arg0: i32, %arg1: i32) -> (i32, i32, i32) {
    %c1_i32 = arith.constant 1 : i32
    %0 = arith.addi %arg1, %c1_i32 : i32
    %c16_i32 = arith.constant 16 : i32
    %1 = arith.muli %0, %c16_i32 : i32
    %c0_i32 = arith.constant 0 : i32
    %c0_i32_0 = arith.constant 0 : i32
    return %arg0, %1, %c0_i32 : i32, i32, i32
  }
  func.func @transform_2(%arg0: i32, %arg1: i32) -> (i32, i32) {
    %c0_i32 = arith.constant 0 : i32
    %c0_i32_0 = arith.constant 0 : i32
    %c0_i32_1 = arith.constant 0 : i32
    return %c0_i32, %c0_i32_0 : i32, i32
  }
  func.func @transform_3(%arg0: i32, %arg1: i32) -> (i32, i32) {
    %c0_i32 = arith.constant 0 : i32
    %c0_i32_0 = arith.constant 0 : i32
    %c0_i32_1 = arith.constant 0 : i32
    return %c0_i32, %c0_i32_0 : i32, i32
  }
  func.func @transform_4(%arg0: i32, %arg1: i32) -> (i32, i32, i32) {
    %c0_i32 = arith.constant 0 : i32
    %c0_i32_0 = arith.constant 0 : i32
    return %arg0, %c0_i32, %arg1 : i32, i32, i32
  }
}

</mosaic_0001>

<llo_original>
// kernel: tpu_custom_call.1
$region0: #{tpu_custom_call.1}
  #allocation0 [shape = 'u32[]', space=smem, size = 0x4, offset = 0x4, fixed_abs, tag = 'smem constant byte address 0x4 - core index']
  #allocation1 [shape = 'u32[144,128]{1,0:T(1,128)}', space=vmem, size = 0x12000, scoped, tag = 'internal scratch']
  #allocation2 [shape = 'f32[136,160]{1,0:T(8,128)}', space=vmem, size = 0x22000, scoped, tag = 'scratch operand']
  %s0 = inlined_call_operand.hbm [shape: f32[2,136,160], index: 0, kind: input, shape index: {}]
  %s1 = inlined_call_operand.hbm [shape: f32[2,136,160], index: 1, kind: input, shape index: {}]
  %s2 = inlined_call_operand.hbm [shape: bf16[480,512], index: 2, kind: input, shape index: {}]
  %s3 = inlined_call_operand.hbm [shape: f32[256,128], index: 3, kind: input, shape index: {}]
  %s4 = inlined_call_operand.hbm [shape: f32[2,64,128], index: 4, kind: output, shape index: {}]
  %s5 = sld [smem:[#allocation0]]
  $region65: #{tpu_custom_call.1} parent=0
    _
  %s7 = ssub.s32 1, %s5
  %s8 = scalar_select 0, %s7, %s5
  $region1: #{tpu_custom_call.1} parent=0
    #allocation3 [shape = 'u8[262144]{0}', space=vmem, size = 0x40000, scoped, tag = 'input window, operand 0']
    #allocation4 [shape = 's32[2]{0}', space=sflag, size = 0x8, scoped, tag = 'scoped memory for tpu_custom_call.1']
    #allocation5 [shape = 's32[2]{0}', space=sflag, size = 0x8, scoped, tag = 'scoped memory for tpu_custom_call.1']
    #allocation6 [shape = 'u8[16384]{0}', space=vmem, size = 0x4000, scoped, tag = 'input window, operand 1']
    #allocation7 [shape = 's32[2]{0}', space=sflag, size = 0x8, scoped, tag = 'scoped memory for tpu_custom_call.1']
    #allocation8 [shape = 'u8[491520]{0}', space=vmem, size = 0x78000, scoped, tag = 'input window, operand 2, single buffered']
    #allocation9 [shape = 'u8[131072]{0}', space=vmem, size = 0x20000, scoped, tag = 'input window, operand 3, single buffered']
    #allocation10 [shape = 's32[1]{0}', space=sflag, size = 0x4, scoped, tag = 'scoped memory for tpu_custom_call.1']
    #allocation11 [shape = 'u8[65536]{0}', space=vmem, size = 0x10000, scoped, tag = 'output window, operand 0']
    %9 = vsyncpa [#allocation4], 0
    %s10 = scalar_lea.sflag [#allocation4], 1
    %11 = vsyncpa %s10, 0
    %12 = vsyncpa [#allocation7], 0
    %s13 = scalar_lea.sflag [#allocation7], 1
    %14 = vsyncpa %s13, 0
    %15 = vsyncpa [#allocation10], 0
    %16 = vsyncpa [#allocation5], 0
    %s17 = scalar_lea.sflag [#allocation5], 1
    %18 = vsyncpa %s17, 0
    loop: start=0, step=1, limit=4
    $region2: #{tpu_custom_call.1} parent=1 // loop_pre_header
      _
    $region3: #{tpu_custom_call.1} parent=1 // loop_header
      %s20 = sphi 0, %s24
      %p21 = scmp.ge.s32.totalorder %s20, 4
      %s27 = sphi 0, %s39
      %s28 = sphi 0, %s35
      %s29 = sphi 0, %s27
      %s30 = sphi 0, %s28
      %s31 = sphi 0, %s29
      %s32 = sphi 0, %s30
      %s44 = sphi 0, %s46
      %s47 = sphi 0, %s44
      %s48 = sphi 0, %s47
      %s64 = sphi 0, %s48
      %s76 = sphi 0, %s78
      %s79 = sphi 0, %s76
      %s80 = sphi 0, %s79
      %s96 = sphi 0, %s80
      %s100 = sphi 0, %s100
      %s102 = sphi 0, %s100
      %s103 = sphi 0, %s102
      %s117 = sphi 0, %s103
      %s121 = sphi 0, %s121
      %s123 = sphi 0, %s121
      %s124 = sphi 0, %s123
      %s138 = sphi 0, %s124
      %s146 = sphi 0, %s148
      %s149 = sphi 0, %s146
      %s150 = sphi 0, %s149
      %s166 = sphi 0, %s150
    $region4: #{tpu_custom_call.1} parent=1 // loop_header_branch
      %23 = sbr.rel (%p21) target = $region8
    $region5: #{tpu_custom_call.1} parent=1 // loop_body
      %s25 = ssub.s32 %s20, 1
      %s26 = ssub.s32 %s20, 2
      %s33 = sadd.s32 1, %s28
      %p34 = scmp.ge.s32.totalorder %s33, 1
      %s35 = scalar_select %p34, 0, %s33
      %s36 = sadd.s32 1, %s27
      %s37 = scalar_select %p34, %s36, %s27
      %p38 = scmp.ge.s32.totalorder %s37, 2
      %s39 = scalar_select %p38, 0, %s37
      %s40 = ssub.s32 %s27, %s39
      %s41 = ssub.s32 %s28, %s35
      %s42 = sor.u32 %s40, %s41
      %p43 = scmp.eq.s32.totalorder %s42, 0
      %s45 = sadd.s32 %s44, 1
      %s46 = scalar_select %p43, %s44, %s45
      %p49 = pneg %p43
      %p50 = scmp.eq.s32.totalorder %s20, 1
      %p51 = por %p49, %p50
      %p52 = scmp.ne.s32.totalorder %s44, %s47
      %p53 = scmp.eq.s32.totalorder %s20, 0
      %p54 = por %p52, %p53
      %p55 = scmp.ne.s32.totalorder %s44, %s47
      %p56 = scmp.eq.s32.totalorder %s25, 1
      %p57 = por %p55, %p56
      %p58 = scmp.ne.s32.totalorder %s47, %s48
      %p59 = scmp.eq.s32.totalorder %s25, 0
      %p60 = por %p58, %p59
      %p61 = scmp.ne.s32.totalorder %s47, %s48
      %p62 = scmp.eq.s32.totalorder %s26, 1
      %p63 = por %p61, %p62
      %p65 = scmp.ne.s32.totalorder %s48, %s64
      %p66 = scmp.eq.s32.totalorder %s26, 0
      %p67 = por %p65, %p66
      %s68 = sadd.s32 %s28, 1
      %s69 = smul.u32 %s68, 16
      %s70 = sadd.s32 %s35, 1
      %s71 = smul.u32 %s70, 16
      %s72 = ssub.s32 %s27, %s39
      %s73 = ssub.s32 %s69, %s71
      %s74 = sor.u32 %s72, %s73
      %p75 = scmp.eq.s32.totalorder %s74, 0
      %s77 = sadd.s32 %s76, 1
      %s78 = scalar_select %p75, %s76, %s77
      %p81 = pneg %p75
      %p82 = scmp.eq.s32.totalorder %s20, 1
      %p83 = por %p81, %p82
      %p84 = scmp.ne.s32.totalorder %s76, %s79
      %p85 = scmp.eq.s32.totalorder %s20, 0
      %p86 = por %p84, %p85
      %p87 = scmp.ne.s32.totalorder %s76, %s79
      %p88 = scmp.eq.s32.totalorder %s25, 1
      %p89 = por %p87, %p88
      %p90 = scmp.ne.s32.totalorder %s79, %s80
      %p91 = scmp.eq.s32.totalorder %s25, 0
      %p92 = por %p90, %p91
      %p93 = scmp.ne.s32.totalorder %s79, %s80
      %p94 = scmp.eq.s32.totalorder %s26, 1
      %p95 = por %p93, %p94
      %p97 = scmp.ne.s32.totalorder %s80, %s96
      %p98 = scmp.eq.s32.totalorder %s26, 0
      %p99 = por %p97, %p98
      %s101 = sadd.s32 %s100, 1
      %p104 = scmp.eq.s32.totalorder %s20, 1
      %p105 = scmp.ne.s32.totalorder %s100, %s102
      %p106 = scmp.eq.s32.totalorder %s20, 0
      %p107 = por %p105, %p106
      %p108 = scmp.ne.s32.totalorder %s100, %s102
      %p109 = scmp.eq.s32.totalorder %s25, 1
      %p110 = por %p108, %p109
      %p111 = scmp.ne.s32.totalorder %s102, %s103
      %p112 = scmp.eq.s32.totalorder %s25, 0
      %p113 = por %p111, %p112
      %p114 = scmp.ne.s32.totalorder %s102, %s103
      %p115 = scmp.eq.s32.totalorder %s26, 1
      %p116 = por %p114, %p115
      %p118 = scmp.ne.s32.totalorder %s103, %s117
      %p119 = scmp.eq.s32.totalorder %s26, 0
      %p120 = por %p118, %p119
      %s122 = sadd.s32 %s121, 1
      %p125 = scmp.eq.s32.totalorder %s20, 1
      %p126 = scmp.ne.s32.totalorder %s121, %s123
      %p127 = scmp.eq.s32.totalorder %s20, 0
      %p128 = por %p126, %p127
      %p129 = scmp.ne.s32.totalorder %s121, %s123
      %p130 = scmp.eq.s32.totalorder %s25, 1
      %p131 = por %p129, %p130
      %p132 = scmp.ne.s32.totalorder %s123, %s124
      %p133 = scmp.eq.s32.totalorder %s25, 0
      %p134 = por %p132, %p133
      %p135 = scmp.ne.s32.totalorder %s123, %s124
      %p136 = scmp.eq.s32.totalorder %s26, 1
      %p137 = por %p135, %p136
      %p139 = scmp.ne.s32.totalorder %s124, %s138
      %p140 = scmp.eq.s32.totalorder %s26, 0
      %p141 = por %p139, %p140
      %s142 = ssub.s32 %s27, %s39
      %s143 = ssub.s32 %s28, %s35
      %s144 = sor.u32 %s142, %s143
      %p145 = scmp.eq.s32.totalorder %s144, 0
      %s147 = sadd.s32 %s146, 1
      %s148 = scalar_select %p145, %s146, %s147
      %p151 = pneg %p145
      %p152 = scmp.eq.s32.totalorder %s20, 1
      %p153 = por %p151, %p152
      %p154 = scmp.ne.s32.totalorder %s146, %s149
      %p155 = scmp.eq.s32.totalorder %s20, 0
      %p156 = por %p154, %p155
      %p157 = scmp.ne.s32.totalorder %s146, %s149
      %p158 = scmp.eq.s32.totalorder %s25, 1
      %p159 = por %p157, %p158
      %p160 = scmp.ne.s32.totalorder %s149, %s150
      %p161 = scmp.eq.s32.totalorder %s25, 0
      %p162 = por %p160, %p161
      %p163 = scmp.ne.s32.totalorder %s149, %s150
      %p164 = scmp.eq.s32.totalorder %s26, 1
      %p165 = por %p163, %p164
      %p167 = scmp.ne.s32.totalorder %s150, %s166
      %p168 = scmp.eq.s32.totalorder %s26, 0
      %p169 = por %p167, %p168
      %p170 = scmp.le.s32.totalorder 1, %s20
      %p171 = scmp.lt.s32.totalorder %s20, 3
      %p172 = pnand %p170, %p171
      %p173 = pneg %p172
      // Predicated region
      $region9: #{tpu_custom_call.1} parent=5 // pred_check
        _
      $region10: #{tpu_custom_call.1} parent=5 // pred_check_branch
        %175 = sbr.rel (%p172) target = $region12
      $region11: #{tpu_custom_call.1} parent=5 // pred_region
        %s176 = ssub.s32 %s20, 1
        // Predicated region
        $region13: #{tpu_custom_call.1} parent=11 // pred_check
          %p177 = pneg %p113
        $region14: #{tpu_custom_call.1} parent=11 // pred_check_branch
          %179 = sbr.rel (%p177) target = $region16
        $region15: #{tpu_custom_call.1} parent=11 // pred_region
          %s181 = ssub.s32 15360, 15360
          %182 = vsyncadd [#allocation7], %s181
          %s183 = sshll.u32 [#allocation8], 4
          %s184 = int_to_ptr.vmem [resolvable:$true] %s183
          %189 = dma.hbm_to_vmem [thread:$0]  %s2, 15360, %s184, [#allocation7], 256, 256, 16
        $region16: #{tpu_custom_call.1} parent=11 // pred_fallthru
          _
        // Predicated region
        $region17: #{tpu_custom_call.1} parent=11 // pred_check
          %p190 = pneg %p134
        $region18: #{tpu_custom_call.1} parent=11 // pred_check_branch
          %192 = sbr.rel (%p190) target = $region20
        $region19: #{tpu_custom_call.1} parent=11 // pred_region
          %s194 = ssub.s32 4096, 4096
          %195 = vsyncadd [#allocation10], %s194
          %s196 = sshll.u32 [#allocation9], 4
          %s197 = int_to_ptr.vmem [resolvable:$true] %s196
          %202 = dma.hbm_to_vmem [thread:$0]  %s3, 4096, %s197, [#allocation10], 128, 128, 8
        $region20: #{tpu_custom_call.1} parent=11 // pred_fallthru
          _
      $region12: #{tpu_custom_call.1} parent=5 // pred_fallthru
        _
      %p203 = scmp.lt.s32.totalorder %s20, 2
      // Predicated region
      $region21: #{tpu_custom_call.1} parent=5 // pred_check
        %p204 = pneg %p203
      $region22: #{tpu_custom_call.1} parent=5 // pred_check_branch
        %206 = sbr.rel (%p204) target = $region24
      $region23: #{tpu_custom_call.1} parent=5 // pred_region
        // Predicated region
        $region25: #{tpu_custom_call.1} parent=23 // pred_check
          %p207 = pneg %p54
        $region26: #{tpu_custom_call.1} parent=23 // pred_check_branch
          %209 = sbr.rel (%p207) target = $region28
        $region27: #{tpu_custom_call.1} parent=23 // pred_region
          %s210 = sand.u32 %s44, 1
          %s211 = scalar_lea.sflag [#allocation4], %s210
          %s212 = sand.u32 %s44, 1
          %s213 = smul.addr %s212, 256
          %s214 = scalar_lea.vmem [#allocation3], %s213
          %s215 = smul.u32 16, %s28
          %s216 = ssub.s32 17, %s215
          %p217 = scmp.lt.s32.totalorder %s216, 16
          %s218 = scalar_select %p217, %s216, 16
          %s219 = smul.u32 128, %s218
          %s220 = smul.u32 %s219, 2
          %s222 = ssub.s32 4096, %s220
          %223 = vsyncadd %s211, %s222
          %p224 = scmp.ne.s32.totalorder 0, %s220
          %s225 = smul.addr %s215, 2
          %s226 = smul.addr %s27, 34
          %s227 = sadd.s32 %s225, %s226
          %s228 = smul.addr %s227, 128
          %s229 = scalar_lea.hbm %s0, %s228
          %s230 = smul.u32 16, %s218
          %s231 = sshll.u32 %s214, 4
          %s232 = int_to_ptr.vmem [resolvable:$true] %s231
          %s233 = sshll.u32 %s230, 4
          %237 = dma.hbm_to_vmem [thread:$0]  (%p224), %s229, %s233, %s232, %s211, 256, 256, 16
        $region28: #{tpu_custom_call.1} parent=23 // pred_fallthru
          _
        // Predicated region
        $region29: #{tpu_custom_call.1} parent=23 // pred_check
          %p238 = pneg %p86
        $region30: #{tpu_custom_call.1} parent=23 // pred_check_branch
          %240 = sbr.rel (%p238) target = $region32
        $region31: #{tpu_custom_call.1} parent=23 // pred_region
          %s241 = sand.u32 %s20, 1
          %s242 = scalar_lea.sflag [#allocation7], %s241
          %s243 = sand.u32 %s76, 1
          %s244 = smul.addr %s243, 16
          %s245 = scalar_lea.vmem [#allocation6], %s244
          %s246 = sadd.s32 %s28, 1
          %s247 = smul.u32 %s246, 16
          %s249 = ssub.s32 256, 256
          %250 = vsyncadd %s242, %s249
          %s251 = smul.addr %s247, 2
          %s252 = smul.addr %s27, 34
          %s253 = sadd.s32 %s251, %s252
          %s254 = smul.addr %s253, 128
          %s255 = scalar_lea.hbm %s1, %s254
          %s257 = sshll.u32 %s245, 4
          %s258 = int_to_ptr.vmem [resolvable:$true] %s257
          %260 = dma.hbm_to_vmem [thread:$0]  %s255, 256, %s258, %s242
        $region32: #{tpu_custom_call.1} parent=23 // pred_fallthru
          _
      $region24: #{tpu_custom_call.1} parent=5 // pred_fallthru
        _
      %p261 = scmp.le.s32.totalorder 1, %s20
      %p262 = scmp.lt.s32.totalorder %s20, 3
      %p263 = pnand %p261, %p262
      %p264 = pneg %p263
      // Predicated region
      $region33: #{tpu_custom_call.1} parent=5 // pred_check
        _
      $region34: #{tpu_custom_call.1} parent=5 // pred_check_branch
        %266 = sbr.rel (%p263) target = $region36
      $region35: #{tpu_custom_call.1} parent=5 // pred_region
        %s267 = ssub.s32 %s20, 1
        %s268 = sand.u32 %s47, 1
        %s269 = scalar_lea.sflag [#allocation4], %s268
        %s270 = sand.u32 %s47, 1
        %s271 = smul.addr %s270, 256
        %s272 = scalar_lea.vmem [#allocation3], %s271
        // Predicated region
        $region37: #{tpu_custom_call.1} parent=35 // pred_check
          %p273 = pneg %p60
        $region38: #{tpu_custom_call.1} parent=35 // pred_check_branch
          %275 = sbr.rel (%p273) target = $region40
        $region39: #{tpu_custom_call.1} parent=35 // pred_region
          %276 = dma.done %s269, 4096
        $region40: #{tpu_custom_call.1} parent=35 // pred_fallthru
          _
        %s277 = sand.u32 %s25, 1
        %s278 = scalar_lea.sflag [#allocation7], %s277
        %s279 = sand.u32 %s79, 1
        %s280 = smul.addr %s279, 16
        %s281 = scalar_lea.vmem [#allocation6], %s280
        // Predicated region
        $region41: #{tpu_custom_call.1} parent=35 // pred_check
          %p282 = pneg %p92
        $region42: #{tpu_custom_call.1} parent=35 // pred_check_branch
          %284 = sbr.rel (%p282) target = $region44
        $region43: #{tpu_custom_call.1} parent=35 // pred_region
          %285 = dma.done %s278, 256
        $region44: #{tpu_custom_call.1} parent=35 // pred_fallthru
          _
        // Predicated region
        $region45: #{tpu_custom_call.1} parent=35 // pred_check
          %p286 = pneg %p113
        $region46: #{tpu_custom_call.1} parent=35 // pred_check_branch
          %288 = sbr.rel (%p286) target = $region48
        $region47: #{tpu_custom_call.1} parent=35 // pred_region
          %289 = dma.done [#allocation7], 15360
        $region48: #{tpu_custom_call.1} parent=35 // pred_fallthru
          _
        // Predicated region
        $region49: #{tpu_custom_call.1} parent=35 // pred_check
          %p290 = pneg %p134
        $region50: #{tpu_custom_call.1} parent=35 // pred_check_branch
          %292 = sbr.rel (%p290) target = $region52
        $region51: #{tpu_custom_call.1} parent=35 // pred_region
          %293 = dma.done [#allocation10], 4096
        $region52: #{tpu_custom_call.1} parent=35 // pred_fallthru
          _
        %s294 = sand.u32 %s47, 1
        %s295 = scalar_lea.sflag [#allocation4], %s294
        %s296 = sand.u32 %s47, 1
        %s297 = smul.addr %s296, 256
        %s298 = scalar_lea.vmem [#allocation3], %s297
        %p299 = pneg %p60
        %p300 = pneg %p57
        %s301 = sand.u32 %s25, 1
        %s302 = scalar_lea.sflag [#allocation7], %s301
        %s303 = sand.u32 %s79, 1
        %s304 = smul.addr %s303, 16
        %s305 = scalar_lea.vmem [#allocation6], %s304
        %p306 = pneg %p92
        %p307 = pneg %p89
        %p308 = pneg %p113
        %p309 = pneg %p110
        %p310 = pneg %p134
        %p311 = pneg %p131
        %p312 = pneg %p162
        %p313 = pneg %p159
        %s314 = sand.u32 %s149, 1
        %s315 = scalar_lea.sflag [#allocation5], %s314
        %s316 = sand.u32 %s149, 1
        %s317 = smul.addr %s316, 64
        %s318 = scalar_lea.vmem [#allocation11], %s317
        %s319 = smul.u32 16, %s30
        %s320 = ssub.s32 17, %s319
        %p321 = scmp.lt.s32.totalorder %s320, 16
        %s322 = scalar_select %p321, %s320, 16
        %s323 = smul.u32 128, %s322
        %s324 = smul.u32 %s323, 2
        %s325 = sadd.s32 %s30, 1
        %s326 = smul.u32 %s325, 16
        %v328 = vld [vmem:[%s272] sm:$0xff]
        %v329 = vld [vmem:[%s272 + $0x8] sm:$0xff]
        %v330 = vld [vmem:[%s272 + $0x10] sm:$0xff]
        %v331 = vld [vmem:[%s272 + $0x18] sm:$0xff]
        %v332 = vld [vmem:[%s272 + $0x20] sm:$0xff]
        %v333 = vld [vmem:[%s272 + $0x28] sm:$0xff]
        %v334 = vld [vmem:[%s272 + $0x30] sm:$0xff]
        %v335 = vld [vmem:[%s272 + $0x38] sm:$0xff]
        %v336 = vld [vmem:[%s272 + $0x40] sm:$0xff]
        %v337 = vld [vmem:[%s272 + $0x48] sm:$0xff]
        %v338 = vld [vmem:[%s272 + $0x50] sm:$0xff]
        %v339 = vld [vmem:[%s272 + $0x58] sm:$0xff]
        %v340 = vld [vmem:[%s272 + $0x60] sm:$0xff]
        %v341 = vld [vmem:[%s272 + $0x68] sm:$0xff]
        %v342 = vld [vmem:[%s272 + $0x70] sm:$0xff]
        %v343 = vld [vmem:[%s272 + $0x78] sm:$0xff]
        %v344 = vld [vmem:[%s272 + $0x80] sm:$0xff]
        %v345 = vld [vmem:[%s272 + $0x88] sm:$0xff]
        %v346 = vld [vmem:[%s272 + $0x90] sm:$0xff]
        %v347 = vld [vmem:[%s272 + $0x98] sm:$0xff]
        %v348 = vld [vmem:[%s272 + $0xa0] sm:$0xff]
        %v349 = vld [vmem:[%s272 + $0xa8] sm:$0xff]
        %v350 = vld [vmem:[%s272 + $0xb0] sm:$0xff]
        %v351 = vld [vmem:[%s272 + $0xb8] sm:$0xff]
        %v352 = vld [vmem:[%s272 + $0xc0] sm:$0xff]
        %v353 = vld [vmem:[%s272 + $0xc8] sm:$0xff]
        %v354 = vld [vmem:[%s272 + $0xd0] sm:$0xff]
        %v355 = vld [vmem:[%s272 + $0xd8] sm:$0xff]
        %v356 = vld [vmem:[%s272 + $0xe0] sm:$0xff]
        %v357 = vld [vmem:[%s272 + $0xe8] sm:$0xff]
        %v358 = vld [vmem:[%s272 + $0xf0] sm:$0xff]
        %v359 = vld [vmem:[%s272 + $0xf8] sm:$0xff]
        %360 = vst [vmem:[#allocation2] sm:$0xff] %v328
        %vm361 = vcmask 261120
        %362 = vst.msk [vmem:[#allocation2 + $0x8] sm:$0xff] %vm361, %v329
        %363 = vst [vmem:[#allocation2 + $0x10] sm:$0xff] %v330
        %364 = vst.msk [vmem:[#allocation2 + $0x18] sm:$0xff] %vm361, %v331
        %365 = vst [vmem:[#allocation2 + $0x20] sm:$0xff] %v332
        %366 = vst.msk [vmem:[#allocation2 + $0x28] sm:$0xff] %vm361, %v333
        %367 = vst [vmem:[#allocation2 + $0x30] sm:$0xff] %v334
        %368 = vst.msk [vmem:[#allocation2 + $0x38] sm:$0xff] %vm361, %v335
        %369 = vst [vmem:[#allocation2 + $0x40] sm:$0xff] %v336
        %370 = vst.msk [vmem:[#allocation2 + $0x48] sm:$0xff] %vm361, %v337
        %371 = vst [vmem:[#allocation2 + $0x50] sm:$0xff] %v338
        %372 = vst.msk [vmem:[#allocation2 + $0x58] sm:$0xff] %vm361, %v339
        %373 = vst [vmem:[#allocation2 + $0x60] sm:$0xff] %v340
        %374 = vst.msk [vmem:[#allocation2 + $0x68] sm:$0xff] %vm361, %v341
        %375 = vst [vmem:[#allocation2 + $0x70] sm:$0xff] %v342
        %376 = vst.msk [vmem:[#allocation2 + $0x78] sm:$0xff] %vm361, %v343
        %377 = vst [vmem:[#allocation2 + $0x80] sm:$0xff] %v344
        %378 = vst.msk [vmem:[#allocation2 + $0x88] sm:$0xff] %vm361, %v345
        %379 = vst [vmem:[#allocation2 + $0x90] sm:$0xff] %v346
        %380 = vst.msk [vmem:[#allocation2 + $0x98] sm:$0xff] %vm361, %v347
        %381 = vst [vmem:[#allocation2 + $0xa0] sm:$0xff] %v348
        %382 = vst.msk [vmem:[#allocation2 + $0xa8] sm:$0xff] %vm361, %v349
        %383 = vst [vmem:[#allocation2 + $0xb0] sm:$0xff] %v350
        %384 = vst.msk [vmem:[#allocation2 + $0xb8] sm:$0xff] %vm361, %v351
        %385 = vst [vmem:[#allocation2 + $0xc0] sm:$0xff] %v352
        %386 = vst.msk [vmem:[#allocation2 + $0xc8] sm:$0xff] %vm361, %v353
        %387 = vst [vmem:[#allocation2 + $0xd0] sm:$0xff] %v354
        %388 = vst.msk [vmem:[#allocation2 + $0xd8] sm:$0xff] %vm361, %v355
        %389 = vst [vmem:[#allocation2 + $0xe0] sm:$0xff] %v356
        %390 = vst.msk [vmem:[#allocation2 + $0xe8] sm:$0xff] %vm361, %v357
        %391 = vst [vmem:[#allocation2 + $0xf0] sm:$0xff] %v358
        %392 = vst.msk [vmem:[#allocation2 + $0xf8] sm:$0xff] %vm361, %v359
        %v393 = vld [vmem:[%s281] sm:$0xff]
        %v394 = vld [vmem:[%s281 + $0x8] sm:$0xff]
        %395 = vst [vmem:[#allocation2 + $0x100] sm:$0xff] %v393
        %396 = vst.msk [vmem:[#allocation2 + $0x108] sm:$0xff] %vm361, %v394
        %v397 = vld [vmem:[#allocation2] sm:$0xff]
        %v398 = vld [vmem:[#allocation2 + $0x8] sm:$0xff]
        %v399 = vld [vmem:[#allocation2 + $0x10] sm:$0xff]
        %v400 = vld [vmem:[#allocation2 + $0x18] sm:$0xff]
        %v401 = vld [vmem:[#allocation2 + $0x20] sm:$0xff]
        %v402 = vld [vmem:[#allocation2 + $0x28] sm:$0xff]
        %v403 = vld [vmem:[#allocation2 + $0x30] sm:$0xff]
        %v404 = vld [vmem:[#allocation2 + $0x38] sm:$0xff]
        %v405 = vld [vmem:[#allocation2 + $0x40] sm:$0xff]
        %v406 = vld [vmem:[#allocation2 + $0x48] sm:$0xff]
        %v407 = vld [vmem:[#allocation2 + $0x50] sm:$0xff]
        %v408 = vld [vmem:[#allocation2 + $0x58] sm:$0xff]
        %v409 = vld [vmem:[#allocation2 + $0x60] sm:$0xff]
        %v410 = vld [vmem:[#allocation2 + $0x68] sm:$0xff]
        %v411 = vld [vmem:[#allocation2 + $0x70] sm:$0xff]
        %v412 = vld [vmem:[#allocation2 + $0x78] sm:$0xff]
        %v413 = vld [vmem:[#allocation2 + $0x80] sm:$0xff]
        %v414 = vld [vmem:[#allocation2 + $0x88] sm:$0xff]
        %v415 = vld [vmem:[#allocation2 + $0x90] sm:$0xff]
        %v416 = vld [vmem:[#allocation2 + $0x98] sm:$0xff]
        %v417 = vld [vmem:[#allocation2 + $0xa0] sm:$0xff]
        %v418 = vld [vmem:[#allocation2 + $0xa8] sm:$0xff]
        %v419 = vld [vmem:[#allocation2 + $0xb0] sm:$0xff]
        %v420 = vld [vmem:[#allocation2 + $0xb8] sm:$0xff]
        %v421 = vld [vmem:[#allocation2 + $0xc0] sm:$0xff]
        %v422 = vld [vmem:[#allocation2 + $0xc8] sm:$0xff]
        %v423 = vld [vmem:[#allocation2 + $0xd0] sm:$0xff]
        %v424 = vld [vmem:[#allocation2 + $0xd8] sm:$0xff]
        %v425 = vld [vmem:[#allocation2 + $0xe0] sm:$0xff]
        %v426 = vld [vmem:[#allocation2 + $0xe8] sm:$0xff]
        %v427 = vld [vmem:[#allocation2 + $0xf0] sm:$0xff]
        %v428 = vld [vmem:[#allocation2 + $0xf8] sm:$0xff]
        %v429 = vpack.c.bf16 %v399, %v397
        %v430 = vpack.c.bf16 %v400, %v398
        %v431 = vpack.c.bf16 %v403, %v401
        %v432 = vpack.c.bf16 %v404, %v402
        %v433 = vpack.c.bf16 %v407, %v405
        %v434 = vpack.c.bf16 %v408, %v406
        %v435 = vpack.c.bf16 %v411, %v409
        %v436 = vpack.c.bf16 %v412, %v410
        %v437 = vpack.c.bf16 %v415, %v413
        %v438 = vpack.c.bf16 %v416, %v414
        %v439 = vpack.c.bf16 %v419, %v417
        %v440 = vpack.c.bf16 %v420, %v418
        %v441 = vpack.c.bf16 %v423, %v421
        %v442 = vpack.c.bf16 %v424, %v422
        %v443 = vpack.c.bf16 %v427, %v425
        %v444 = vpack.c.bf16 %v428, %v426
        %v445 = vld [vmem:[#allocation8] sm:$0xff]
        %v446 = vld [vmem:[#allocation8 + $0x8] sm:$0xff]
        %v447 = vld [vmem:[#allocation8 + $0x10] sm:$0xff]
        %v448 = vld [vmem:[#allocation8 + $0x18] sm:$0xff]
        %v449 = vld [vmem:[#allocation8 + $0x20] sm:$0xff]
        %v450 = vld [vmem:[#allocation8 + $0x28] sm:$0xff]
        %v451 = vld [vmem:[#allocation8 + $0x30] sm:$0xff]
        %v452 = vld [vmem:[#allocation8 + $0x38] sm:$0xff]
        %v453 = vld [vmem:[#allocation8 + $0x40] sm:$0xff]
        %v454 = vld [vmem:[#allocation8 + $0x48] sm:$0xff]
        %v455 = vld [vmem:[#allocation8 + $0x50] sm:$0xff]
        %v456 = vld [vmem:[#allocation8 + $0x58] sm:$0xff]
        %v457 = vld [vmem:[#allocation8 + $0x60] sm:$0xff]
        %v458 = vld [vmem:[#allocation8 + $0x68] sm:$0xff]
        %v459 = vld [vmem:[#allocation8 + $0x70] sm:$0xff]
        %v460 = vld [vmem:[#allocation8 + $0x78] sm:$0xff]
        %v461 = vld [vmem:[#allocation8 + $0x80] sm:$0xff]
        %v462 = vld [vmem:[#allocation8 + $0x88] sm:$0xff]
        %v463 = vld [vmem:[#allocation8 + $0x90] sm:$0xff]
        %v464 = vld [vmem:[#allocation8 + $0x98] sm:$0xff]
        %v465 = vld [vmem:[#allocation8 + $0xa0] sm:$0xff]
        %v466 = vld [vmem:[#allocation8 + $0xa8] sm:$0xff]
        %v467 = vld [vmem:[#allocation8 + $0xb0] sm:$0xff]
        %v468 = vld [vmem:[#allocation8 + $0xb8] sm:$0xff]
        %v469 = vld [vmem:[#allocation8 + $0xc0] sm:$0xff]
        %v470 = vld [vmem:[#allocation8 + $0xc8] sm:$0xff]
        %v471 = vld [vmem:[#allocation8 + $0xd0] sm:$0xff]
        %v472 = vld [vmem:[#allocation8 + $0xd8] sm:$0xff]
        %v473 = vld [vmem:[#allocation8 + $0xe0] sm:$0xff]
        %v474 = vld [vmem:[#allocation8 + $0xe8] sm:$0xff]
        %v475 = vld [vmem:[#allocation8 + $0xf0] sm:$0xff]
        %v476 = vld [vmem:[#allocation8 + $0xf8] sm:$0xff]
        %v477 = vld [vmem:[#allocation8 + $0x100] sm:$0xff]
        %v478 = vld [vmem:[#allocation8 + $0x108] sm:$0xff]
        %v479 = vld [vmem:[#allocation8 + $0x110] sm:$0xff]
        %v480 = vld [vmem:[#allocation8 + $0x118] sm:$0xff]
        %v481 = vld [vmem:[#allocation8 + $0x120] sm:$0xff]
        %v482 = vld [vmem:[#allocation8 + $0x128] sm:$0xff]
        %v483 = vld [vmem:[#allocation8 + $0x130] sm:$0xff]
        %v484 = vld [vmem:[#allocation8 + $0x138] sm:$0xff]
        %v485 = vld [vmem:[#allocation2] sm:$0xfe]
        %v486 = vld [vmem:[#allocation2 + $0x8] sm:$0xfe]
        %v487 = vld [vmem:[#allocation2 + $0x100] sm:$0x1]
        %v488 = vld [vmem:[#allocation2 + $0x108] sm:$0x1]
        %v489 = vpack.c.bf16 %v399, %v485
        %v490 = vpack.c.bf16 %v400, %v486
        %v491 = vpack.c.bf16 %v487, %v487
        %v492 = vpack.c.bf16 %v488, %v488
        %v493 = vld [vmem:[#allocation8 + $0x140] sm:$0xff]
        %v494 = vld [vmem:[#allocation8 + $0x148] sm:$0xff]
        %v495 = vld [vmem:[#allocation8 + $0x150] sm:$0xff]
        %v496 = vld [vmem:[#allocation8 + $0x158] sm:$0xff]
        %v497 = vld [vmem:[#allocation8 + $0x160] sm:$0xff]
        %v498 = vld [vmem:[#allocation8 + $0x168] sm:$0xff]
        %v499 = vld [vmem:[#allocation8 + $0x170] sm:$0xff]
        %v500 = vld [vmem:[#allocation8 + $0x178] sm:$0xff]
        %v501 = vld [vmem:[#allocation8 + $0x180] sm:$0xff]
        %v502 = vld [vmem:[#allocation8 + $0x188] sm:$0xff]
        %v503 = vld [vmem:[#allocation8 + $0x190] sm:$0xff]
        %v504 = vld [vmem:[#allocation8 + $0x198] sm:$0xff]
        %v505 = vld [vmem:[#allocation8 + $0x1a0] sm:$0xff]
        %v506 = vld [vmem:[#allocation8 + $0x1a8] sm:$0xff]
        %v507 = vld [vmem:[#allocation8 + $0x1b0] sm:$0xff]
        %v508 = vld [vmem:[#allocation8 + $0x1b8] sm:$0xff]
        %v509 = vld [vmem:[#allocation8 + $0x1c0] sm:$0xff]
        %v510 = vld [vmem:[#allocation8 + $0x1c8] sm:$0xff]
        %v511 = vld [vmem:[#allocation8 + $0x1d0] sm:$0xff]
        %v512 = vld [vmem:[#allocation8 + $0x1d8] sm:$0xff]
        %v513 = vld [vmem:[#allocation8 + $0x1e0] sm:$0xff]
        %v514 = vld [vmem:[#allocation8 + $0x1e8] sm:$0xff]
        %v515 = vld [vmem:[#allocation8 + $0x1f0] sm:$0xff]
        %v516 = vld [vmem:[#allocation8 + $0x1f8] sm:$0xff]
        %v517 = vld [vmem:[#allocation8 + $0x200] sm:$0xff]
        %v518 = vld [vmem:[#allocation8 + $0x208] sm:$0xff]
        %v519 = vld [vmem:[#allocation8 + $0x210] sm:$0xff]
        %v520 = vld [vmem:[#allocation8 + $0x218] sm:$0xff]
        %v521 = vld [vmem:[#allocation8 + $0x220] sm:$0xff]
        %v522 = vld [vmem:[#allocation8 + $0x228] sm:$0xff]
        %v523 = vld [vmem:[#allocation8 + $0x230] sm:$0xff]
        %v524 = vld [vmem:[#allocation8 + $0x238] sm:$0xff]
        %v525 = vld [vmem:[#allocation8 + $0x240] sm:$0xff]
        %v526 = vld [vmem:[#allocation8 + $0x248] sm:$0xff]
        %v527 = vld [vmem:[#allocation8 + $0x250] sm:$0xff]
        %v528 = vld [vmem:[#allocation8 + $0x258] sm:$0xff]
        %v529 = vld [vmem:[#allocation8 + $0x260] sm:$0xff]
        %v530 = vld [vmem:[#allocation8 + $0x268] sm:$0xff]
        %v531 = vld [vmem:[#allocation8 + $0x270] sm:$0xff]
        %v532 = vld [vmem:[#allocation8 + $0x278] sm:$0xff]
        %vm533 = vsmask.f32 7424
        %v535 = vshrl.u32 %v489, 16
        %v537 = vshll.u32 %v489, 16
        %v539 = vrot.slane %v537, 1
        %v540 = vor.u32 %v535, %v539
        %v542 = vshll.u32 %v431, 16
        %v544 = vrot.slane %v542, 1
        %v545 = vsel %vm533, %v540, %v544
        %v547 = vshrl.u32 %v490, 16
        %v549 = vshll.u32 %v490, 16
        %v551 = vrot.slane %v549, 1
        %v552 = vor.u32 %v547, %v551
        %v554 = vshll.u32 %v432, 16
        %v556 = vrot.slane %v554, 1
        %v557 = vsel %vm533, %v552, %v556
        %v558 = vshrl.u32 %v431, 16
        %v560 = vor.u32 %v558, %v544
        %v562 = vshll.u32 %v433, 16
        %v564 = vrot.slane %v562, 1
        %v565 = vsel %vm533, %v560, %v564
        %v566 = vshrl.u32 %v432, 16
        %v568 = vor.u32 %v566, %v556
        %v570 = vshll.u32 %v434, 16
        %v572 = vrot.slane %v570, 1
        %v573 = vsel %vm533, %v568, %v572
        %v574 = vshrl.u32 %v433, 16
        %v576 = vor.u32 %v574, %v564
        %v578 = vshll.u32 %v435, 16
        %v580 = vrot.slane %v578, 1
        %v581 = vsel %vm533, %v576, %v580
        %v582 = vshrl.u32 %v434, 16
        %v584 = vor.u32 %v582, %v572
        %v586 = vshll.u32 %v436, 16
        %v588 = vrot.slane %v586, 1
        %v589 = vsel %vm533, %v584, %v588
        %v590 = vshrl.u32 %v435, 16
        %v592 = vor.u32 %v590, %v580
        %v594 = vshll.u32 %v437, 16
        %v596 = vrot.slane %v594, 1
        %v597 = vsel %vm533, %v592, %v596
        %v598 = vshrl.u32 %v436, 16
        %v600 = vor.u32 %v598, %v588
        %v602 = vshll.u32 %v438, 16
        %v604 = vrot.slane %v602, 1
        %v605 = vsel %vm533, %v600, %v604
        %v606 = vshrl.u32 %v437, 16
        %v608 = vor.u32 %v606, %v596
        %v610 = vshll.u32 %v439, 16
        %v612 = vrot.slane %v610, 1
        %v613 = vsel %vm533, %v608, %v612
        %v614 = vshrl.u32 %v438, 16
        %v616 = vor.u32 %v614, %v604
        %v618 = vshll.u32 %v440, 16
        %v620 = vrot.slane %v618, 1
        %v621 = vsel %vm533, %v616, %v620
        %v622 = vshrl.u32 %v439, 16
        %v624 = vor.u32 %v622, %v612
        %v626 = vshll.u32 %v441, 16
        %v628 = vrot.slane %v626, 1
        %v629 = vsel %vm533, %v624, %v628
        %v630 = vshrl.u32 %v440, 16
        %v632 = vor.u32 %v630, %v620
        %v634 = vshll.u32 %v442, 16
        %v636 = vrot.slane %v634, 1
        %v637 = vsel %vm533, %v632, %v636
        %v638 = vshrl.u32 %v441, 16
        %v640 = vor.u32 %v638, %v628
        %v642 = vshll.u32 %v443, 16
        %v644 = vrot.slane %v642, 1
        %v645 = vsel %vm533, %v640, %v644
        %v646 = vshrl.u32 %v442, 16
        %v648 = vor.u32 %v646, %v636
        %v650 = vshll.u32 %v444, 16
        %v652 = vrot.slane %v650, 1
        %v653 = vsel %vm533, %v648, %v652
        %v654 = vshrl.u32 %v443, 16
        %v656 = vor.u32 %v654, %v644
        %v658 = vshll.u32 %v491, 16
        %v660 = vrot.slane %v658, 1
        %v661 = vsel %vm533, %v656, %v660
        %v662 = vshrl.u32 %v444, 16
        %v664 = vor.u32 %v662, %v652
        %v666 = vshll.u32 %v492, 16
        %v668 = vrot.slane %v666, 1
        %v669 = vsel %vm533, %v664, %v668
        %v718 = vunpack.c.l.b16 %v493
        %v719 = vunpack.c.h.b16 %v493
        %v720 = vunpack.c.l.b16 %v494
        %v721 = vunpack.c.h.b16 %v494
        %v722 = vunpack.c.l.b16 %v495
        %v723 = vunpack.c.h.b16 %v495
        %v724 = vunpack.c.l.b16 %v496
        %v725 = vunpack.c.h.b16 %v496
        %v726 = vunpack.c.l.b16 %v497
        %v727 = vunpack.c.h.b16 %v497
        %v728 = vunpack.c.l.b16 %v498
        %v729 = vunpack.c.h.b16 %v498
        %v730 = vunpack.c.l.b16 %v499
        %v731 = vunpack.c.h.b16 %v499
        %v732 = vunpack.c.l.b16 %v500
        %v733 = vunpack.c.h.b16 %v500
        %v734 = vunpack.c.l.b16 %v501
        %v735 = vunpack.c.h.b16 %v501
        %v736 = vunpack.c.l.b16 %v502
        %v737 = vunpack.c.h.b16 %v502
        %v738 = vunpack.c.l.b16 %v503
        %v739 = vunpack.c.h.b16 %v503
        %v740 = vunpack.c.l.b16 %v504
        %v741 = vunpack.c.h.b16 %v504
        %v742 = vunpack.c.l.b16 %v505
        %v743 = vunpack.c.h.b16 %v505
        %v744 = vunpack.c.l.b16 %v506
        %v745 = vunpack.c.h.b16 %v506
        %v746 = vunpack.c.l.b16 %v507
        %v747 = vunpack.c.h.b16 %v507
        %v748 = vunpack.c.l.b16 %v508
        %v749 = vunpack.c.h.b16 %v508
        %v750 = vunpack.c.l.b16 %v509
        %v751 = vunpack.c.h.b16 %v509
        %v752 = vunpack.c.l.b16 %v510
        %v753 = vunpack.c.h.b16 %v510
        %v754 = vunpack.c.l.b16 %v511
        %v755 = vunpack.c.h.b16 %v511
        %v756 = vunpack.c.l.b16 %v512
        %v757 = vunpack.c.h.b16 %v512
        %v758 = vunpack.c.l.b16 %v513
        %v759 = vunpack.c.h.b16 %v513
        %v760 = vunpack.c.l.b16 %v514
        %v761 = vunpack.c.h.b16 %v514
        %v762 = vunpack.c.l.b16 %v515
        %v763 = vunpack.c.h.b16 %v515
        %v764 = vunpack.c.l.b16 %v516
        %v765 = vunpack.c.h.b16 %v516
        %v766 = vunpack.c.l.b16 %v517
        %v767 = vunpack.c.h.b16 %v517
        %v768 = vunpack.c.l.b16 %v518
        %v769 = vunpack.c.h.b16 %v518
        %v770 = vunpack.c.l.b16 %v519
        %v771 = vunpack.c.h.b16 %v519
        %v772 = vunpack.c.l.b16 %v520
        %v773 = vunpack.c.h.b16 %v520
        %v774 = vunpack.c.l.b16 %v521
        %v775 = vunpack.c.h.b16 %v521
        %v776 = vunpack.c.l.b16 %v522
        %v777 = vunpack.c.h.b16 %v522
        %v778 = vunpack.c.l.b16 %v523
        %v779 = vunpack.c.h.b16 %v523
        %v780 = vunpack.c.l.b16 %v524
        %v781 = vunpack.c.h.b16 %v524
        %v782 = vunpack.c.l.b16 %v525
        %v783 = vunpack.c.h.b16 %v525
        %v784 = vunpack.c.l.b16 %v526
        %v785 = vunpack.c.h.b16 %v526
        %v786 = vunpack.c.l.b16 %v527
        %v787 = vunpack.c.h.b16 %v527
        %v788 = vunpack.c.l.b16 %v528
        %v789 = vunpack.c.h.b16 %v528
        %v790 = vunpack.c.l.b16 %v529
        %v791 = vunpack.c.h.b16 %v529
        %v792 = vunpack.c.l.b16 %v530
        %v793 = vunpack.c.h.b16 %v530
        %v794 = vunpack.c.l.b16 %v531
        %v795 = vunpack.c.h.b16 %v531
        %v796 = vunpack.c.l.b16 %v532
        %v797 = vunpack.c.h.b16 %v532
        %v798 = vpack.c.b16 %v722, %v718
        %v799 = vpack.c.b16 %v723, %v719
        %v800 = vpack.c.b16 %v724, %v720
        %v801 = vpack.c.b16 %v725, %v721
        %v802 = vpack.c.b16 %v730, %v726
        %v803 = vpack.c.b16 %v731, %v727
        %v804 = vpack.c.b16 %v732, %v728
        %v805 = vpack.c.b16 %v733, %v729
        %v806 = vpack.c.b16 %v738, %v734
        %v807 = vpack.c.b16 %v739, %v735
        %v808 = vpack.c.b16 %v740, %v736
        %v809 = vpack.c.b16 %v741, %v737
        %v810 = vpack.c.b16 %v746, %v742
        %v811 = vpack.c.b16 %v747, %v743
        %v812 = vpack.c.b16 %v748, %v744
        %v813 = vpack.c.b16 %v749, %v745
        %v814 = vpack.c.b16 %v754, %v750
        %v815 = vpack.c.b16 %v755, %v751
        %v816 = vpack.c.b16 %v756, %v752
        %v817 = vpack.c.b16 %v757, %v753
        %v818 = vpack.c.b16 %v762, %v758
        %v819 = vpack.c.b16 %v763, %v759
        %v820 = vpack.c.b16 %v764, %v760
        %v821 = vpack.c.b16 %v765, %v761
        %v822 = vpack.c.b16 %v770, %v766
        %v823 = vpack.c.b16 %v771, %v767
        %v824 = vpack.c.b16 %v772, %v768
        %v825 = vpack.c.b16 %v773, %v769
        %v826 = vpack.c.b16 %v778, %v774
        %v827 = vpack.c.b16 %v779, %v775
        %v828 = vpack.c.b16 %v780, %v776
        %v829 = vpack.c.b16 %v781, %v777
        %v830 = vpack.c.b16 %v786, %v782
        %v831 = vpack.c.b16 %v787, %v783
        %v832 = vpack.c.b16 %v788, %v784
        %v833 = vpack.c.b16 %v789, %v785
        %v834 = vpack.c.b16 %v794, %v790
        %v835 = vpack.c.b16 %v795, %v791
        %v836 = vpack.c.b16 %v796, %v792
        %v837 = vpack.c.b16 %v797, %v793
        %v879 = vsel %vm361, %v557, 0
        %v882 = vsel %vm361, %v573, 0
        %v885 = vsel %vm361, %v589, 0
        %v888 = vsel %vm361, %v605, 0
        %v891 = vsel %vm361, %v621, 0
        %v894 = vsel %vm361, %v637, 0
        %v897 = vsel %vm361, %v653, 0
        %v900 = vsel %vm361, %v669, 0
        %902 = vmatprep.subr.bf16.mxu0 %v799
        %903 = vmatpush1.bf16.msra.mxu0 %v798
        %904 = vmatprep.subr.bf16.mxu0 %v803
        %905 = vmatpush1.bf16.msra.mxu0 %v802
        %906 = vmatprep.subr.bf16.mxu0 %v807
        %907 = vmatpush1.bf16.msra.mxu0 %v806
        %908 = vmatprep.subr.bf16.mxu0 %v811
        %909 = vmatpush1.bf16.msra.mxu0 %v810
        %910 = vmatprep.subr.bf16.mxu0 %v815
        %911 = vmatpush1.bf16.msra.mxu0 %v814
        %912 = vmatprep.subr.bf16.mxu0 %v819
        %913 = vmatpush1.bf16.msra.mxu0 %v818
        %914 = vmatprep.subr.bf16.mxu0 %v823
        %915 = vmatpush1.bf16.msra.mxu0 %v822
        %916 = vmatprep.subr.bf16.mxu0 %v827
        %917 = vmatpush1.bf16.msra.mxu0 %v826
        %918 = vmatprep.subr.bf16.mxu0 %v831
        %919 = vmatpush1.bf16.msra.mxu0 %v830
        %920 = vmatprep.subr.bf16.mxu0 %v835
        %921 = vmatpush1.bf16.msra.mxu0 %v834
        %922 = vmatprep.subr.bf16.mxu0 0
        %923 = vmatpush1.bf16.msra.mxu0 0
        %924 = vmatprep.subr.bf16.mxu0 0
        %925 = vmatpush1.bf16.msra.mxu0 0
        %926 = vmatprep.subr.bf16.mxu0 0
        %927 = vmatpush1.bf16.msra.mxu0 0
        %928 = vmatprep.subr.bf16.mxu0 0
        %929 = vmatpush1.bf16.msra.mxu0 0
        %930 = vmatprep.subr.bf16.mxu0 0
        %931 = vmatpush1.bf16.msra.mxu0 0
        %932 = vmatprep.subr.bf16.mxu0 0
        %933 = vmatpush1.bf16.msra.mxu0 0
        %934 = vmatprep.mubr.bf16.mxu0 %v879
        %935 = vmatmul.mubr.bf16.gmra.mrb[0].mxu0 %v545
        %v936 = vpop.f32.mrb[0].mxu0
        %v937 = vadd.f32 0.0, %v936
        %v938 = vpop.f32.mrb[0].mxu0
        %v939 = vadd.f32 0.0, %v938
        %v940 = vpop.f32.mrb[0].mxu0
        %v941 = vadd.f32 0.0, %v940
        %v942 = vpop.f32.mrb[0].mxu0
        %v943 = vadd.f32 0.0, %v942
        %944 = vmatprep.mubr.bf16.mxu0 %v882
        %945 = vmatmul.mubr.bf16.gmra.mrb[0].mxu0 %v565
        %v946 = vpop.f32.mrb[0].mxu0
        %v947 = vadd.f32 0.0, %v946
        %v948 = vpop.f32.mrb[0].mxu0
        %v949 = vadd.f32 0.0, %v948
        %v950 = vpop.f32.mrb[0].mxu0
        %v951 = vadd.f32 0.0, %v950
        %v952 = vpop.f32.mrb[0].mxu0
        %v953 = vadd.f32 0.0, %v952
        %954 = vmatprep.mubr.bf16.mxu0 %v885
        %955 = vmatmul.mubr.bf16.gmra.mrb[0].mxu0 %v581
        %v956 = vpop.f32.mrb[0].mxu0
        %v957 = vadd.f32 0.0, %v956
        %v958 = vpop.f32.mrb[0].mxu0
        %v959 = vadd.f32 0.0, %v958
        %v960 = vpop.f32.mrb[0].mxu0
        %v961 = vadd.f32 0.0, %v960
        %v962 = vpop.f32.mrb[0].mxu0
        %v963 = vadd.f32 0.0, %v962
        %964 = vmatprep.mubr.bf16.mxu0 %v888
        %965 = vmatmul.mubr.bf16.gmra.mrb[0].mxu0 %v597
        %v966 = vpop.f32.mrb[0].mxu0
        %v967 = vadd.f32 0.0, %v966
        %v968 = vpop.f32.mrb[0].mxu0
        %v969 = vadd.f32 0.0, %v968
        %v970 = vpop.f32.mrb[0].mxu0
        %v971 = vadd.f32 0.0, %v970
        %v972 = vpop.f32.mrb[0].mxu0
        %v973 = vadd.f32 0.0, %v972
        %974 = vmatprep.mubr.bf16.mxu0 %v891
        %975 = vmatmul.mubr.bf16.gmra.mrb[0].mxu0 %v613
        %v976 = vpop.f32.mrb[0].mxu0
        %v977 = vadd.f32 0.0, %v976
        %v978 = vpop.f32.mrb[0].mxu0
        %v979 = vadd.f32 0.0, %v978
        %v980 = vpop.f32.mrb[0].mxu0
        %v981 = vadd.f32 0.0, %v980
        %v982 = vpop.f32.mrb[0].mxu0
        %v983 = vadd.f32 0.0, %v982
        %984 = vmatprep.mubr.bf16.mxu0 %v894
        %985 = vmatmul.mubr.bf16.gmra.mrb[0].mxu0 %v629
        %v986 = vpop.f32.mrb[0].mxu0
        %v987 = vadd.f32 0.0, %v986
        %v988 = vpop.f32.mrb[0].mxu0
        %v989 = vadd.f32 0.0, %v988
        %v990 = vpop.f32.mrb[0].mxu0
        %v991 = vadd.f32 0.0, %v990
        %v992 = vpop.f32.mrb[0].mxu0
        %v993 = vadd.f32 0.0, %v992
        %994 = vmatprep.mubr.bf16.mxu0 %v897
        %995 = vmatmul.mubr.bf16.gmra.mrb[0].mxu0 %v645
        %v996 = vpop.f32.mrb[0].mxu0
        %v997 = vadd.f32 0.0, %v996
        %v998 = vpop.f32.mrb[0].mxu0
        %v999 = vadd.f32 0.0, %v998
        %v1000 = vpop.f32.mrb[0].mxu0
        %v1001 = vadd.f32 0.0, %v1000
        %v1002 = vpop.f32.mrb[0].mxu0
        %v1003 = vadd.f32 0.0, %v1002
        %1004 = vmatprep.mubr.bf16.mxu0 %v900
        %1005 = vmatmul.mubr.bf16.gmra.mrb[0].mxu0 %v661
        %v1006 = vpop.f32.mrb[0].mxu0
        %v1007 = vadd.f32 0.0, %v1006
        %v1008 = vpop.f32.mrb[0].mxu0
        %v1009 = vadd.f32 0.0, %v1008
        %v1010 = vpop.f32.mrb[0].mxu0
        %v1011 = vadd.f32 0.0, %v1010
        %v1012 = vpop.f32.mrb[0].mxu0
        %v1013 = vadd.f32 0.0, %v1012
        %1014 = vdwg.mxu0
        %1015 = vmatprep.subr.bf16.mxu0 %v801
        %1016 = vmatpush1.bf16.msra.mxu0 %v800
        %1017 = vmatprep.subr.bf16.mxu0 %v805
        %1018 = vmatpush1.bf16.msra.mxu0 %v804
        %1019 = vmatprep.subr.bf16.mxu0 %v809
        %1020 = vmatpush1.bf16.msra.mxu0 %v808
        %1021 = vmatprep.subr.bf16.mxu0 %v813
        %1022 = vmatpush1.bf16.msra.mxu0 %v812
        %1023 = vmatprep.subr.bf16.mxu0 %v817
        %1024 = vmatpush1.bf16.msra.mxu0 %v816
        %1025 = vmatprep.subr.bf16.mxu0 %v821
        %1026 = vmatpush1.bf16.msra.mxu0 %v820
        %1027 = vmatprep.subr.bf16.mxu0 %v825
        %1028 = vmatpush1.bf16.msra.mxu0 %v824
        %1029 = vmatprep.subr.bf16.mxu0 %v829
        %1030 = vmatpush1.bf16.msra.mxu0 %v828
        %1031 = vmatprep.subr.bf16.mxu0 %v833
        %1032 = vmatpush1.bf16.msra.mxu0 %v832
        %1033 = vmatprep.subr.bf16.mxu0 %v837
        %1034 = vmatpush1.bf16.msra.mxu0 %v836
        %1035 = vmatprep.subr.bf16.mxu0 0
        %1036 = vmatpush1.bf16.msra.mxu0 0
        %1037 = vmatprep.subr.bf16.mxu0 0
        %1038 = vmatpush1.bf16.msra.mxu0 0
        %1039 = vmatprep.subr.bf16.mxu0 0
        %1040 = vmatpush1.bf16.msra.mxu0 0
        %1041 = vmatprep.subr.bf16.mxu0 0
        %1042 = vmatpush1.bf16.msra.mxu0 0
        %1043 = vmatprep.subr.bf16.mxu0 0
        %1044 = vmatpush1.bf16.msra.mxu0 0
        %1045 = vmatprep.subr.bf16.mxu0 0
        %1046 = vmatpush1.bf16.msra.mxu0 0
        %1047 = vmatprep.mubr.bf16.mxu0 %v879
        %1048 = vmatmul.mubr.bf16.gmra.mrb[0].mxu0 %v545
        %v1049 = vpop.f32.mrb[0].mxu0
        %v1050 = vadd.f32 0.0, %v1049
        %v1051 = vpop.f32.mrb[0].mxu0
        %v1052 = vadd.f32 0.0, %v1051
        %v1053 = vpop.f32.mrb[0].mxu0
        %v1054 = vadd.f32 0.0, %v1053
        %v1055 = vpop.f32.mrb[0].mxu0
        %v1056 = vadd.f32 0.0, %v1055
        %1057 = vmatprep.mubr.bf16.mxu0 %v882
        %1058 = vmatmul.mubr.bf16.gmra.mrb[0].mxu0 %v565
        %v1059 = vpop.f32.mrb[0].mxu0
        %v1060 = vadd.f32 0.0, %v1059
        %v1061 = vpop.f32.mrb[0].mxu0
        %v1062 = vadd.f32 0.0, %v1061
        %v1063 = vpop.f32.mrb[0].mxu0
        %v1064 = vadd.f32 0.0, %v1063
        %v1065 = vpop.f32.mrb[0].mxu0
        %v1066 = vadd.f32 0.0, %v1065
        %1067 = vmatprep.mubr.bf16.mxu0 %v885
        %1068 = vmatmul.mubr.bf16.gmra.mrb[0].mxu0 %v581
        %v1069 = vpop.f32.mrb[0].mxu0
        %v1070 = vadd.f32 0.0, %v1069
        %v1071 = vpop.f32.mrb[0].mxu0
        %v1072 = vadd.f32 0.0, %v1071
        %v1073 = vpop.f32.mrb[0].mxu0
        %v1074 = vadd.f32 0.0, %v1073
        %v1075 = vpop.f32.mrb[0].mxu0
        %v1076 = vadd.f32 0.0, %v1075
        %1077 = vmatprep.mubr.bf16.mxu0 %v888
        %1078 = vmatmul.mubr.bf16.gmra.mrb[0].mxu0 %v597
        %v1079 = vpop.f32.mrb[0].mxu0
        %v1080 = vadd.f32 0.0, %v1079
        %v1081 = vpop.f32.mrb[0].mxu0
        %v1082 = vadd.f32 0.0, %v1081
        %v1083 = vpop.f32.mrb[0].mxu0
        %v1084 = vadd.f32 0.0, %v1083
        %v1085 = vpop.f32.mrb[0].mxu0
        %v1086 = vadd.f32 0.0, %v1085
        %1087 = vmatprep.mubr.bf16.mxu0 %v891
        %1088 = vmatmul.mubr.bf16.gmra.mrb[0].mxu0 %v613
        %v1089 = vpop.f32.mrb[0].mxu0
        %v1090 = vadd.f32 0.0, %v1089
        %v1091 = vpop.f32.mrb[0].mxu0
        %v1092 = vadd.f32 0.0, %v1091
        %v1093 = vpop.f32.mrb[0].mxu0
        %v1094 = vadd.f32 0.0, %v1093
        %v1095 = vpop.f32.mrb[0].mxu0
        %v1096 = vadd.f32 0.0, %v1095
        %1097 = vmatprep.mubr.bf16.mxu0 %v894
        %1098 = vmatmul.mubr.bf16.gmra.mrb[0].mxu0 %v629
        %v1099 = vpop.f32.mrb[0].mxu0
        %v1100 = vadd.f32 0.0, %v1099
        %v1101 = vpop.f32.mrb[0].mxu0
        %v1102 = vadd.f32 0.0, %v1101
        %v1103 = vpop.f32.mrb[0].mxu0
        %v1104 = vadd.f32 0.0, %v1103
        %v1105 = vpop.f32.mrb[0].mxu0
        %v1106 = vadd.f32 0.0, %v1105
        %1107 = vmatprep.mubr.bf16.mxu0 %v897
        %1108 = vmatmul.mubr.bf16.gmra.mrb[0].mxu0 %v645
        %v1109 = vpop.f32.mrb[0].mxu0
        %v1110 = vadd.f32 0.0, %v1109
        %v1111 = vpop.f32.mrb[0].mxu0
        %v1112 = vadd.f32 0.0, %v1111
        %v1113 = vpop.f32.mrb[0].mxu0
        %v1114 = vadd.f32 0.0, %v1113
        %v1115 = vpop.f32.mrb[0].mxu0
        %v1116 = vadd.f32 0.0, %v1115
        %1117 = vmatprep.mubr.bf16.mxu0 %v900
        %1118 = vmatmul.mubr.bf16.gmra.mrb[0].mxu0 %v661
        %v1119 = vpop.f32.mrb[0].mxu0
        %v1120 = vadd.f32 0.0, %v1119
        %v1121 = vpop.f32.mrb[0].mxu0
        %v1122 = vadd.f32 0.0, %v1121
        %v1123 = vpop.f32.mrb[0].mxu0
        %v1124 = vadd.f32 0.0, %v1123
        %v1125 = vpop.f32.mrb[0].mxu0
        %v1126 = vadd.f32 0.0, %v1125
        %1127 = vdwg.mxu0
        %v1168 = vunpack.c.l.b16 %v445
        %v1169 = vunpack.c.h.b16 %v445
        %v1170 = vunpack.c.l.b16 %v446
        %v1171 = vunpack.c.h.b16 %v446
        %v1172 = vunpack.c.l.b16 %v447
        %v1173 = vunpack.c.h.b16 %v447
        %v1174 = vunpack.c.l.b16 %v448
        %v1175 = vunpack.c.h.b16 %v448
        %v1176 = vunpack.c.l.b16 %v449
        %v1177 = vunpack.c.h.b16 %v449
        %v1178 = vunpack.c.l.b16 %v450
        %v1179 = vunpack.c.h.b16 %v450
        %v1180 = vunpack.c.l.b16 %v451
        %v1181 = vunpack.c.h.b16 %v451
        %v1182 = vunpack.c.l.b16 %v452
        %v1183 = vunpack.c.h.b16 %v452
        %v1184 = vunpack.c.l.b16 %v453
        %v1185 = vunpack.c.h.b16 %v453
        %v1186 = vunpack.c.l.b16 %v454
        %v1187 = vunpack.c.h.b16 %v454
        %v1188 = vunpack.c.l.b16 %v455
        %v1189 = vunpack.c.h.b16 %v455
        %v1190 = vunpack.c.l.b16 %v456
        %v1191 = vunpack.c.h.b16 %v456
        %v1192 = vunpack.c.l.b16 %v457
        %v1193 = vunpack.c.h.b16 %v457
        %v1194 = vunpack.c.l.b16 %v458
        %v1195 = vunpack.c.h.b16 %v458
        %v1196 = vunpack.c.l.b16 %v459
        %v1197 = vunpack.c.h.b16 %v459
        %v1198 = vunpack.c.l.b16 %v460
        %v1199 = vunpack.c.h.b16 %v460
        %v1200 = vunpack.c.l.b16 %v461
        %v1201 = vunpack.c.h.b16 %v461
        %v1202 = vunpack.c.l.b16 %v462
        %v1203 = vunpack.c.h.b16 %v462
        %v1204 = vunpack.c.l.b16 %v463
        %v1205 = vunpack.c.h.b16 %v463
        %v1206 = vunpack.c.l.b16 %v464
        %v1207 = vunpack.c.h.b16 %v464
        %v1208 = vunpack.c.l.b16 %v465
        %v1209 = vunpack.c.h.b16 %v465
        %v1210 = vunpack.c.l.b16 %v466
        %v1211 = vunpack.c.h.b16 %v466
        %v1212 = vunpack.c.l.b16 %v467
        %v1213 = vunpack.c.h.b16 %v467
        %v1214 = vunpack.c.l.b16 %v468
        %v1215 = vunpack.c.h.b16 %v468
        %v1216 = vunpack.c.l.b16 %v469
        %v1217 = vunpack.c.h.b16 %v469
        %v1218 = vunpack.c.l.b16 %v470
        %v1219 = vunpack.c.h.b16 %v470
        %v1220 = vunpack.c.l.b16 %v471
        %v1221 = vunpack.c.h.b16 %v471
        %v1222 = vunpack.c.l.b16 %v472
        %v1223 = vunpack.c.h.b16 %v472
        %v1224 = vunpack.c.l.b16 %v473
        %v1225 = vunpack.c.h.b16 %v473
        %v1226 = vunpack.c.l.b16 %v474
        %v1227 = vunpack.c.h.b16 %v474
        %v1228 = vunpack.c.l.b16 %v475
        %v1229 = vunpack.c.h.b16 %v475
        %v1230 = vunpack.c.l.b16 %v476
        %v1231 = vunpack.c.h.b16 %v476
        %v1232 = vunpack.c.l.b16 %v477
        %v1233 = vunpack.c.h.b16 %v477
        %v1234 = vunpack.c.l.b16 %v478
        %v1235 = vunpack.c.h.b16 %v478
        %v1236 = vunpack.c.l.b16 %v479
        %v1237 = vunpack.c.h.b16 %v479
        %v1238 = vunpack.c.l.b16 %v480
        %v1239 = vunpack.c.h.b16 %v480
        %v1240 = vunpack.c.l.b16 %v481
        %v1241 = vunpack.c.h.b16 %v481
        %v1242 = vunpack.c.l.b16 %v482
        %v1243 = vunpack.c.h.b16 %v482
        %v1244 = vunpack.c.l.b16 %v483
        %v1245 = vunpack.c.h.b16 %v483
        %v1246 = vunpack.c.l.b16 %v484
        %v1247 = vunpack.c.h.b16 %v484
        %v1248 = vpack.c.b16 %v1172, %v1168
        %v1249 = vpack.c.b16 %v1173, %v1169
        %v1250 = vpack.c.b16 %v1174, %v1170
        %v1251 = vpack.c.b16 %v1175, %v1171
        %v1252 = vpack.c.b16 %v1180, %v1176
        %v1253 = vpack.c.b16 %v1181, %v1177
        %v1254 = vpack.c.b16 %v1182, %v1178
        %v1255 = vpack.c.b16 %v1183, %v1179
        %v1256 = vpack.c.b16 %v1188, %v1184
        %v1257 = vpack.c.b16 %v1189, %v1185
        %v1258 = vpack.c.b16 %v1190, %v1186
        %v1259 = vpack.c.b16 %v1191, %v1187
        %v1260 = vpack.c.b16 %v1196, %v1192
        %v1261 = vpack.c.b16 %v1197, %v1193
        %v1262 = vpack.c.b16 %v1198, %v1194
        %v1263 = vpack.c.b16 %v1199, %v1195
        %v1264 = vpack.c.b16 %v1204, %v1200
        %v1265 = vpack.c.b16 %v1205, %v1201
        %v1266 = vpack.c.b16 %v1206, %v1202
        %v1267 = vpack.c.b16 %v1207, %v1203
        %v1268 = vpack.c.b16 %v1212, %v1208
        %v1269 = vpack.c.b16 %v1213, %v1209
        %v1270 = vpack.c.b16 %v1214, %v1210
        %v1271 = vpack.c.b16 %v1215, %v1211
        %v1272 = vpack.c.b16 %v1220, %v1216
        %v1273 = vpack.c.b16 %v1221, %v1217
        %v1274 = vpack.c.b16 %v1222, %v1218
        %v1275 = vpack.c.b16 %v1223, %v1219
        %v1276 = vpack.c.b16 %v1228, %v1224
        %v1277 = vpack.c.b16 %v1229, %v1225
        %v1278 = vpack.c.b16 %v1230, %v1226
        %v1279 = vpack.c.b16 %v1231, %v1227
        %v1280 = vpack.c.b16 %v1236, %v1232
        %v1281 = vpack.c.b16 %v1237, %v1233
        %v1282 = vpack.c.b16 %v1238, %v1234
        %v1283 = vpack.c.b16 %v1239, %v1235
        %v1284 = vpack.c.b16 %v1244, %v1240
        %v1285 = vpack.c.b16 %v1245, %v1241
        %v1286 = vpack.c.b16 %v1246, %v1242
        %v1287 = vpack.c.b16 %v1247, %v1243
        %v1329 = vsel %vm361, %v430, 0
        %v1331 = vsel %vm361, %v432, 0
        %v1333 = vsel %vm361, %v434, 0
        %v1335 = vsel %vm361, %v436, 0
        %v1337 = vsel %vm361, %v438, 0
        %v1339 = vsel %vm361, %v440, 0
        %v1341 = vsel %vm361, %v442, 0
        %v1343 = vsel %vm361, %v444, 0
        %1345 = vmatprep.subr.bf16.mxu0 %v1249
        %1346 = vmatpush1.bf16.msra.mxu0 %v1248
        %1347 = vmatprep.subr.bf16.mxu0 %v1253
        %1348 = vmatpush1.bf16.msra.mxu0 %v1252
        %1349 = vmatprep.subr.bf16.mxu0 %v1257
        %1350 = vmatpush1.bf16.msra.mxu0 %v1256
        %1351 = vmatprep.subr.bf16.mxu0 %v1261
        %1352 = vmatpush1.bf16.msra.mxu0 %v1260
        %1353 = vmatprep.subr.bf16.mxu0 %v1265
        %1354 = vmatpush1.bf16.msra.mxu0 %v1264
        %1355 = vmatprep.subr.bf16.mxu0 %v1269
        %1356 = vmatpush1.bf16.msra.mxu0 %v1268
        %1357 = vmatprep.subr.bf16.mxu0 %v1273
        %1358 = vmatpush1.bf16.msra.mxu0 %v1272
        %1359 = vmatprep.subr.bf16.mxu0 %v1277
        %1360 = vmatpush1.bf16.msra.mxu0 %v1276
        %1361 = vmatprep.subr.bf16.mxu0 %v1281
        %1362 = vmatpush1.bf16.msra.mxu0 %v1280
        %1363 = vmatprep.subr.bf16.mxu0 %v1285
        %1364 = vmatpush1.bf16.msra.mxu0 %v1284
        %1365 = vmatprep.subr.bf16.mxu0 0
        %1366 = vmatpush1.bf16.msra.mxu0 0
        %1367 = vmatprep.subr.bf16.mxu0 0
        %1368 = vmatpush1.bf16.msra.mxu0 0
        %1369 = vmatprep.subr.bf16.mxu0 0
        %1370 = vmatpush1.bf16.msra.mxu0 0
        %1371 = vmatprep.subr.bf16.mxu0 0
        %1372 = vmatpush1.bf16.msra.mxu0 0
        %1373 = vmatprep.subr.bf16.mxu0 0
        %1374 = vmatpush1.bf16.msra.mxu0 0
        %1375 = vmatprep.subr.bf16.mxu0 0
        %1376 = vmatpush1.bf16.msra.mxu0 0
        %1377 = vmatprep.mubr.bf16.mxu0 %v1329
        %1378 = vmatmul.mubr.bf16.gmra.mrb[0].mxu0 %v429
        %v1379 = vpop.f32.mrb[0].mxu0
        %v1380 = vadd.f32 %v937, %v1379
        %v1381 = vpop.f32.mrb[0].mxu0
        %v1382 = vadd.f32 %v939, %v1381
        %v1383 = vpop.f32.mrb[0].mxu0
        %v1384 = vadd.f32 %v941, %v1383
        %v1385 = vpop.f32.mrb[0].mxu0
        %v1386 = vadd.f32 %v943, %v1385
        %1387 = vmatprep.mubr.bf16.mxu0 %v1331
        %1388 = vmatmul.mubr.bf16.gmra.mrb[0].mxu0 %v431
        %v1389 = vpop.f32.mrb[0].mxu0
        %v1390 = vadd.f32 %v947, %v1389
        %v1391 = vpop.f32.mrb[0].mxu0
        %v1392 = vadd.f32 %v949, %v1391
        %v1393 = vpop.f32.mrb[0].mxu0
        %v1394 = vadd.f32 %v951, %v1393
        %v1395 = vpop.f32.mrb[0].mxu0
        %v1396 = vadd.f32 %v953, %v1395
        %1397 = vmatprep.mubr.bf16.mxu0 %v1333
        %1398 = vmatmul.mubr.bf16.gmra.mrb[0].mxu0 %v433
        %v1399 = vpop.f32.mrb[0].mxu0
        %v1400 = vadd.f32 %v957, %v1399
        %v1401 = vpop.f32.mrb[0].mxu0
        %v1402 = vadd.f32 %v959, %v1401
        %v1403 = vpop.f32.mrb[0].mxu0
        %v1404 = vadd.f32 %v961, %v1403
        %v1405 = vpop.f32.mrb[0].mxu0
        %v1406 = vadd.f32 %v963, %v1405
        %1407 = vmatprep.mubr.bf16.mxu0 %v1335
        %1408 = vmatmul.mubr.bf16.gmra.mrb[0].mxu0 %v435
        %v1409 = vpop.f32.mrb[0].mxu0
        %v1410 = vadd.f32 %v967, %v1409
        %v1411 = vpop.f32.mrb[0].mxu0
        %v1412 = vadd.f32 %v969, %v1411
        %v1413 = vpop.f32.mrb[0].mxu0
        %v1414 = vadd.f32 %v971, %v1413
        %v1415 = vpop.f32.mrb[0].mxu0
        %v1416 = vadd.f32 %v973, %v1415
        %1417 = vmatprep.mubr.bf16.mxu0 %v1337
        %1418 = vmatmul.mubr.bf16.gmra.mrb[0].mxu0 %v437
        %v1419 = vpop.f32.mrb[0].mxu0
        %v1420 = vadd.f32 %v977, %v1419
        %v1421 = vpop.f32.mrb[0].mxu0
        %v1422 = vadd.f32 %v979, %v1421
        %v1423 = vpop.f32.mrb[0].mxu0
        %v1424 = vadd.f32 %v981, %v1423
        %v1425 = vpop.f32.mrb[0].mxu0
        %v1426 = vadd.f32 %v983, %v1425
        %1427 = vmatprep.mubr.bf16.mxu0 %v1339
        %1428 = vmatmul.mubr.bf16.gmra.mrb[0].mxu0 %v439
        %v1429 = vpop.f32.mrb[0].mxu0
        %v1430 = vadd.f32 %v987, %v1429
        %v1431 = vpop.f32.mrb[0].mxu0
        %v1432 = vadd.f32 %v989, %v1431
        %v1433 = vpop.f32.mrb[0].mxu0
        %v1434 = vadd.f32 %v991, %v1433
        %v1435 = vpop.f32.mrb[0].mxu0
        %v1436 = vadd.f32 %v993, %v1435
        %1437 = vmatprep.mubr.bf16.mxu0 %v1341
        %1438 = vmatmul.mubr.bf16.gmra.mrb[0].mxu0 %v441
        %v1439 = vpop.f32.mrb[0].mxu0
        %v1440 = vadd.f32 %v997, %v1439
        %v1441 = vpop.f32.mrb[0].mxu0
        %v1442 = vadd.f32 %v999, %v1441
        %v1443 = vpop.f32.mrb[0].mxu0
        %v1444 = vadd.f32 %v1001, %v1443
        %v1445 = vpop.f32.mrb[0].mxu0
        %v1446 = vadd.f32 %v1003, %v1445
        %1447 = vmatprep.mubr.bf16.mxu0 %v1343
        %1448 = vmatmul.mubr.bf16.gmra.mrb[0].mxu0 %v443
        %v1449 = vpop.f32.mrb[0].mxu0
        %v1450 = vadd.f32 %v1007, %v1449
        %v1451 = vpop.f32.mrb[0].mxu0
        %v1452 = vadd.f32 %v1009, %v1451
        %v1453 = vpop.f32.mrb[0].mxu0
        %v1454 = vadd.f32 %v1011, %v1453
        %v1455 = vpop.f32.mrb[0].mxu0
        %v1456 = vadd.f32 %v1013, %v1455
        %1457 = vdwg.mxu0
        %1458 = vmatprep.subr.bf16.mxu0 %v1251
        %1459 = vmatpush1.bf16.msra.mxu0 %v1250
        %1460 = vmatprep.subr.bf16.mxu0 %v1255
        %1461 = vmatpush1.bf16.msra.mxu0 %v1254
        %1462 = vmatprep.subr.bf16.mxu0 %v1259
        %1463 = vmatpush1.bf16.msra.mxu0 %v1258
        %1464 = vmatprep.subr.bf16.mxu0 %v1263
        %1465 = vmatpush1.bf16.msra.mxu0 %v1262
        %1466 = vmatprep.subr.bf16.mxu0 %v1267
        %1467 = vmatpush1.bf16.msra.mxu0 %v1266
        %1468 = vmatprep.subr.bf16.mxu0 %v1271
        %1469 = vmatpush1.bf16.msra.mxu0 %v1270
        %1470 = vmatprep.subr.bf16.mxu0 %v1275
        %1471 = vmatpush1.bf16.msra.mxu0 %v1274
        %1472 = vmatprep.subr.bf16.mxu0 %v1279
        %1473 = vmatpush1.bf16.msra.mxu0 %v1278
        %1474 = vmatprep.subr.bf16.mxu0 %v1283
        %1475 = vmatpush1.bf16.msra.mxu0 %v1282
        %1476 = vmatprep.subr.bf16.mxu0 %v1287
        %1477 = vmatpush1.bf16.msra.mxu0 %v1286
        %1478 = vmatprep.subr.bf16.mxu0 0
        %1479 = vmatpush1.bf16.msra.mxu0 0
        %1480 = vmatprep.subr.bf16.mxu0 0
        %1481 = vmatpush1.bf16.msra.mxu0 0
        %1482 = vmatprep.subr.bf16.mxu0 0
        %1483 = vmatpush1.bf16.msra.mxu0 0
        %1484 = vmatprep.subr.bf16.mxu0 0
        %1485 = vmatpush1.bf16.msra.mxu0 0
        %1486 = vmatprep.subr.bf16.mxu0 0
        %1487 = vmatpush1.bf16.msra.mxu0 0
        %1488 = vmatprep.subr.bf16.mxu0 0
        %1489 = vmatpush1.bf16.msra.mxu0 0
        %1490 = vmatprep.mubr.bf16.mxu0 %v1329
        %1491 = vmatmul.mubr.bf16.gmra.mrb[0].mxu0 %v429
        %v1492 = vpop.f32.mrb[0].mxu0
        %v1493 = vadd.f32 %v1050, %v1492
        %v1494 = vpop.f32.mrb[0].mxu0
        %v1495 = vadd.f32 %v1052, %v1494
        %v1496 = vpop.f32.mrb[0].mxu0
        %v1497 = vadd.f32 %v1054, %v1496
        %v1498 = vpop.f32.mrb[0].mxu0
        %v1499 = vadd.f32 %v1056, %v1498
        %1500 = vmatprep.mubr.bf16.mxu0 %v1331
        %1501 = vmatmul.mubr.bf16.gmra.mrb[0].mxu0 %v431
        %v1502 = vpop.f32.mrb[0].mxu0
        %v1503 = vadd.f32 %v1060, %v1502
        %v1504 = vpop.f32.mrb[0].mxu0
        %v1505 = vadd.f32 %v1062, %v1504
        %v1506 = vpop.f32.mrb[0].mxu0
        %v1507 = vadd.f32 %v1064, %v1506
        %v1508 = vpop.f32.mrb[0].mxu0
        %v1509 = vadd.f32 %v1066, %v1508
        %1510 = vmatprep.mubr.bf16.mxu0 %v1333
        %1511 = vmatmul.mubr.bf16.gmra.mrb[0].mxu0 %v433
        %v1512 = vpop.f32.mrb[0].mxu0
        %v1513 = vadd.f32 %v1070, %v1512
        %v1514 = vpop.f32.mrb[0].mxu0
        %v1515 = vadd.f32 %v1072, %v1514
        %v1516 = vpop.f32.mrb[0].mxu0
        %v1517 = vadd.f32 %v1074, %v1516
        %v1518 = vpop.f32.mrb[0].mxu0
        %v1519 = vadd.f32 %v1076, %v1518
        %1520 = vmatprep.mubr.bf16.mxu0 %v1335
        %1521 = vmatmul.mubr.bf16.gmra.mrb[0].mxu0 %v435
        %v1522 = vpop.f32.mrb[0].mxu0
        %v1523 = vadd.f32 %v1080, %v1522
        %v1524 = vpop.f32.mrb[0].mxu0
        %v1525 = vadd.f32 %v1082, %v1524
        %v1526 = vpop.f32.mrb[0].mxu0
        %v1527 = vadd.f32 %v1084, %v1526
        %v1528 = vpop.f32.mrb[0].mxu0
        %v1529 = vadd.f32 %v1086, %v1528
        %1530 = vmatprep.mubr.bf16.mxu0 %v1337
        %1531 = vmatmul.mubr.bf16.gmra.mrb[0].mxu0 %v437
        %v1532 = vpop.f32.mrb[0].mxu0
        %v1533 = vadd.f32 %v1090, %v1532
        %v1534 = vpop.f32.mrb[0].mxu0
        %v1535 = vadd.f32 %v1092, %v1534
        %v1536 = vpop.f32.mrb[0].mxu0
        %v1537 = vadd.f32 %v1094, %v1536
        %v1538 = vpop.f32.mrb[0].mxu0
        %v1539 = vadd.f32 %v1096, %v1538
        %1540 = vmatprep.mubr.bf16.mxu0 %v1339
        %1541 = vmatmul.mubr.bf16.gmra.mrb[0].mxu0 %v439
        %v1542 = vpop.f32.mrb[0].mxu0
        %v1543 = vadd.f32 %v1100, %v1542
        %v1544 = vpop.f32.mrb[0].mxu0
        %v1545 = vadd.f32 %v1102, %v1544
        %v1546 = vpop.f32.mrb[0].mxu0
        %v1547 = vadd.f32 %v1104, %v1546
        %v1548 = vpop.f32.mrb[0].mxu0
        %v1549 = vadd.f32 %v1106, %v1548
        %1550 = vmatprep.mubr.bf16.mxu0 %v1341
        %1551 = vmatmul.mubr.bf16.gmra.mrb[0].mxu0 %v441
        %v1552 = vpop.f32.mrb[0].mxu0
        %v1553 = vadd.f32 %v1110, %v1552
        %v1554 = vpop.f32.mrb[0].mxu0
        %v1555 = vadd.f32 %v1112, %v1554
        %v1556 = vpop.f32.mrb[0].mxu0
        %v1557 = vadd.f32 %v1114, %v1556
        %v1558 = vpop.f32.mrb[0].mxu0
        %v1559 = vadd.f32 %v1116, %v1558
        %1560 = vmatprep.mubr.bf16.mxu0 %v1343
        %1561 = vmatmul.mubr.bf16.gmra.mrb[0].mxu0 %v443
        %v1562 = vpop.f32.mrb[0].mxu0
        %v1563 = vadd.f32 %v1120, %v1562
        %v1564 = vpop.f32.mrb[0].mxu0
        %v1565 = vadd.f32 %v1122, %v1564
        %v1566 = vpop.f32.mrb[0].mxu0
        %v1567 = vadd.f32 %v1124, %v1566
        %v1568 = vpop.f32.mrb[0].mxu0
        %v1569 = vadd.f32 %v1126, %v1568
        %1570 = vdwg.mxu0
        %v1571 = vld [vmem:[#allocation2] sm:$0xfc]
        %v1572 = vld [vmem:[#allocation2 + $0x8] sm:$0xfc]
        %v1573 = vld [vmem:[#allocation2 + $0x100] sm:$0x3]
        %v1574 = vld [vmem:[#allocation2 + $0x108] sm:$0x3]
        %v1575 = vpack.c.bf16 %v399, %v1571
        %v1576 = vpack.c.bf16 %v400, %v1572
        %v1577 = vpack.c.bf16 %v1573, %v1573
        %v1578 = vpack.c.bf16 %v1574, %v1574
        %v1579 = vld [vmem:[#allocation8 + $0x280] sm:$0xff]
        %v1580 = vld [vmem:[#allocation8 + $0x288] sm:$0xff]
        %v1581 = vld [vmem:[#allocation8 + $0x290] sm:$0xff]
        %v1582 = vld [vmem:[#allocation8 + $0x298] sm:$0xff]
        %v1583 = vld [vmem:[#allocation8 + $0x2a0] sm:$0xff]
        %v1584 = vld [vmem:[#allocation8 + $0x2a8] sm:$0xff]
        %v1585 = vld [vmem:[#allocation8 + $0x2b0] sm:$0xff]
        %v1586 = vld [vmem:[#allocation8 + $0x2b8] sm:$0xff]
        %v1587 = vld [vmem:[#allocation8 + $0x2c0] sm:$0xff]
        %v1588 = vld [vmem:[#allocation8 + $0x2c8] sm:$0xff]
        %v1589 = vld [vmem:[#allocation8 + $0x2d0] sm:$0xff]
        %v1590 = vld [vmem:[#allocation8 + $0x2d8] sm:$0xff]
        %v1591 = vld [vmem:[#allocation8 + $0x2e0] sm:$0xff]
        %v1592 = vld [vmem:[#allocation8 + $0x2e8] sm:$0xff]
        %v1593 = vld [vmem:[#allocation8 + $0x2f0] sm:$0xff]
        %v1594 = vld [vmem:[#allocation8 + $0x2f8] sm:$0xff]
        %v1595 = vld [vmem:[#allocation8 + $0x300] sm:$0xff]
        %v1596 = vld [vmem:[#allocation8 + $0x308] sm:$0xff]
        %v1597 = vld [vmem:[#allocation8 + $0x310] sm:$0xff]
        %v1598 = vld [vmem:[#allocation8 + $0x318] sm:$0xff]
        %v1599 = vld [vmem:[#allocation8 + $0x320] sm:$0xff]
        %v1600 = vld [vmem:[#allocation8 + $0x328] sm:$0xff]
        %v1601 = vld [vmem:[#allocation8 + $0x330] sm:$0xff]
        %v1602 = vld [vmem:[#allocation8 + $0x338] sm:$0xff]
        %v1603 = vld [vmem:[#allocation8 + $0x340] sm:$0xff]
        %v1604 = vld [vmem:[#allocation8 + $0x348] sm:$0xff]
        %v1605 = vld [vmem:[#allocation8 + $0x350] sm:$0xff]
        %v1606 = vld [vmem:[#allocation8 + $0x358] sm:$0xff]
        %v1607 = vld [vmem:[#allocation8 + $0x360] sm:$0xff]
        %v1608 = vld [vmem:[#allocation8 + $0x368] sm:$0xff]
        %v1609 = vld [vmem:[#allocation8 + $0x370] sm:$0xff]
        %v1610 = vld [vmem:[#allocation8 + $0x378] sm:$0xff]
        %v1611 = vld [vmem:[#allocation8 + $0x380] sm:$0xff]
        %v1612 = vld [vmem:[#allocation8 + $0x388] sm:$0xff]
        %v1613 = vld [vmem:[#allocation8 + $0x390] sm:$0xff]
        %v1614 = vld [vmem:[#allocation8 + $0x398] sm:$0xff]
        %v1615 = vld [vmem:[#allocation8 + $0x3a0] sm:$0xff]
        %v1616 = vld [vmem:[#allocation8 + $0x3a8] sm:$0xff]
        %v1617 = vld [vmem:[#allocation8 + $0x3b0] sm:$0xff]
        %v1618 = vld [vmem:[#allocation8 + $0x3b8] sm:$0xff]
        %vm1637 = vcmask 1046528
        %v1638 = vrot.slane %v1575, 1
        %v1639 = vrot.slane %v431, 1
        %v1640 = vsel %vm1637, %v1638, %v1639
        %v1641 = vrot.slane %v1576, 1
        %v1642 = vrot.slane %v432, 1
        %v1643 = vsel %vm1637, %v1641, %v1642
        %v1644 = vrot.slane %v433, 1
        %v1645 = vsel %vm1637, %v1639, %v1644
        %v1646 = vrot.slane %v434, 1
        %v1647 = vsel %vm1637, %v1642, %v1646
        %v1648 = vrot.slane %v435, 1
        %v1649 = vsel %vm1637, %v1644, %v1648
        %v1650 = vrot.slane %v436, 1
        %v1651 = vsel %vm1637, %v1646, %v1650
        %v1652 = vrot.slane %v437, 1
        %v1653 = vsel %vm1637, %v1648, %v1652
        %v1654 = vrot.slane %v438, 1
        %v1655 = vsel %vm1637, %v1650, %v1654
        %v1656 = vrot.slane %v439, 1
        %v1657 = vsel %vm1637, %v1652, %v1656
        %v1658 = vrot.slane %v440, 1
        %v1659 = vsel %vm1637, %v1654, %v1658
        %v1660 = vrot.slane %v441, 1
        %v1661 = vsel %vm1637, %v1656, %v1660
        %v1662 = vrot.slane %v442, 1
        %v1663 = vsel %vm1637, %v1658, %v1662
        %v1664 = vrot.slane %v443, 1
        %v1665 = vsel %vm1637, %v1660, %v1664
        %v1666 = vrot.slane %v444, 1
        %v1667 = vsel %vm1637, %v1662, %v1666
        %v1668 = vrot.slane %v1577, 1
        %v1669 = vsel %vm1637, %v1664, %v1668
        %v1670 = vrot.slane %v1578, 1
        %v1671 = vsel %vm1637, %v1666, %v1670
        %v1720 = vunpack.c.l.b16 %v1579
        %v1721 = vunpack.c.h.b16 %v1579
        %v1722 = vunpack.c.l.b16 %v1580
        %v1723 = vunpack.c.h.b16 %v1580
        %v1724 = vunpack.c.l.b16 %v1581
        %v1725 = vunpack.c.h.b16 %v1581
        %v1726 = vunpack.c.l.b16 %v1582
        %v1727 = vunpack.c.h.b16 %v1582
        %v1728 = vunpack.c.l.b16 %v1583
        %v1729 = vunpack.c.h.b16 %v1583
        %v1730 = vunpack.c.l.b16 %v1584
        %v1731 = vunpack.c.h.b16 %v1584
        %v1732 = vunpack.c.l.b16 %v1585
        %v1733 = vunpack.c.h.b16 %v1585
        %v1734 = vunpack.c.l.b16 %v1586
        %v1735 = vunpack.c.h.b16 %v1586
        %v1736 = vunpack.c.l.b16 %v1587
        %v1737 = vunpack.c.h.b16 %v1587
        %v1738 = vunpack.c.l.b16 %v1588
        %v1739 = vunpack.c.h.b16 %v1588
        %v1740 = vunpack.c.l.b16 %v1589
        %v1741 = vunpack.c.h.b16 %v1589
        %v1742 = vunpack.c.l.b16 %v1590
        %v1743 = vunpack.c.h.b16 %v1590
        %v1744 = vunpack.c.l.b16 %v1591
        %v1745 = vunpack.c.h.b16 %v1591
        %v1746 = vunpack.c.l.b16 %v1592
        %v1747 = vunpack.c.h.b16 %v1592
        %v1748 = vunpack.c.l.b16 %v1593
        %v1749 = vunpack.c.h.b16 %v1593
        %v1750 = vunpack.c.l.b16 %v1594
        %v1751 = vunpack.c.h.b16 %v1594
        %v1752 = vunpack.c.l.b16 %v1595
        %v1753 = vunpack.c.h.b16 %v1595
        %v1754 = vunpack.c.l.b16 %v1596
        %v1755 = vunpack.c.h.b16 %v1596
        %v1756 = vunpack.c.l.b16 %v1597
        %v1757 = vunpack.c.h.b16 %v1597
        %v1758 = vunpack.c.l.b16 %v1598
        %v1759 = vunpack.c.h.b16 %v1598
        %v1760 = vunpack.c.l.b16 %v1599
        %v1761 = vunpack.c.h.b16 %v1599
        %v1762 = vunpack.c.l.b16 %v1600
        %v1763 = vunpack.c.h.b16 %v1600
        %v1764 = vunpack.c.l.b16 %v1601
        %v1765 = vunpack.c.h.b16 %v1601
        %v1766 = vunpack.c.l.b16 %v1602
        %v1767 = vunpack.c.h.b16 %v1602
        %v1768 = vunpack.c.l.b16 %v1603
        %v1769 = vunpack.c.h.b16 %v1603
        %v1770 = vunpack.c.l.b16 %v1604
        %v1771 = vunpack.c.h.b16 %v1604
        %v1772 = vunpack.c.l.b16 %v1605
        %v1773 = vunpack.c.h.b16 %v1605
        %v1774 = vunpack.c.l.b16 %v1606
        %v1775 = vunpack.c.h.b16 %v1606
        %v1776 = vunpack.c.l.b16 %v1607
        %v1777 = vunpack.c.h.b16 %v1607
        %v1778 = vunpack.c.l.b16 %v1608
        %v1779 = vunpack.c.h.b16 %v1608
        %v1780 = vunpack.c.l.b16 %v1609
        %v1781 = vunpack.c.h.b16 %v1609
        %v1782 = vunpack.c.l.b16 %v1610
        %v1783 = vunpack.c.h.b16 %v1610
        %v1784 = vunpack.c.l.b16 %v1611
        %v1785 = vunpack.c.h.b16 %v1611
        %v1786 = vunpack.c.l.b16 %v1612
        %v1787 = vunpack.c.h.b16 %v1612
        %v1788 = vunpack.c.l.b16 %v1613
        %v1789 = vunpack.c.h.b16 %v1613
        %v1790 = vunpack.c.l.b16 %v1614
        %v1791 = vunpack.c.h.b16 %v1614
        %v1792 = vunpack.c.l.b16 %v1615
        %v1793 = vunpack.c.h.b16 %v1615
        %v1794 = vunpack.c.l.b16 %v1616
        %v1795 = vunpack.c.h.b16 %v1616
        %v1796 = vunpack.c.l.b16 %v1617
        %v1797 = vunpack.c.h.b16 %v1617
        %v1798 = vunpack.c.l.b16 %v1618
        %v1799 = vunpack.c.h.b16 %v1618
        %v1800 = vpack.c.b16 %v1724, %v1720
        %v1801 = vpack.c.b16 %v1725, %v1721
        %v1802 = vpack.c.b16 %v1726, %v1722
        %v1803 = vpack.c.b16 %v1727, %v1723
        %v1804 = vpack.c.b16 %v1732, %v1728
        %v1805 = vpack.c.b16 %v1733, %v1729
        %v1806 = vpack.c.b16 %v1734, %v1730
        %v1807 = vpack.c.b16 %v1735, %v1731
        %v1808 = vpack.c.b16 %v1740, %v1736
        %v1809 = vpack.c.b16 %v1741, %v1737
        %v1810 = vpack.c.b16 %v1742, %v1738
        %v1811 = vpack.c.b16 %v1743, %v1739
        %v1812 = vpack.c.b16 %v1748, %v1744
        %v1813 = vpack.c.b16 %v1749, %v1745
        %v1814 = vpack.c.b16 %v1750, %v1746
        %v1815 = vpack.c.b16 %v1751, %v1747
        %v1816 = vpack.c.b16 %v1756, %v1752
        %v1817 = vpack.c.b16 %v1757, %v1753
        %v1818 = vpack.c.b16 %v1758, %v1754
        %v1819 = vpack.c.b16 %v1759, %v1755
        %v1820 = vpack.c.b16 %v1764, %v1760
        %v1821 = vpack.c.b16 %v1765, %v1761
        %v1822 = vpack.c.b16 %v1766, %v1762
        %v1823 = vpack.c.b16 %v1767, %v1763
        %v1824 = vpack.c.b16 %v1772, %v1768
        %v1825 = vpack.c.b16 %v1773, %v1769
        %v1826 = vpack.c.b16 %v1774, %v1770
        %v1827 = vpack.c.b16 %v1775, %v1771
        %v1828 = vpack.c.b16 %v1780, %v1776
        %v1829 = vpack.c.b16 %v1781, %v1777
        %v1830 = vpack.c.b16 %v1782, %v1778
        %v1831 = vpack.c.b16 %v1783, %v1779
        %v1832 = vpack.c.b16 %v1788, %v1784
        %v1833 = vpack.c.b16 %v1789, %v1785
        %v1834 = vpack.c.b16 %v1790, %v1786
        %v1835 = vpack.c.b16 %v1791, %v1787
        %v1836 = vpack.c.b16 %v1796, %v1792
        %v1837 = vpack.c.b16 %v1797, %v1793
        %v1838 = vpack.c.b16 %v1798, %v1794
        %v1839 = vpack.c.b16 %v1799, %v1795
        %v1881 = vsel %vm361, %v1643, 0
        %v1884 = vsel %vm361, %v1647, 0
        %v1887 = vsel %vm361, %v1651, 0
        %v1890 = vsel %vm361, %v1655, 0
        %v1893 = vsel %vm361, %v1659, 0
        %v1896 = vsel %vm361, %v1663, 0
        %v1899 = vsel %vm361, %v1667, 0
        %v1902 = vsel %vm361, %v1671, 0
        %1904 = vmatprep.subr.bf16.mxu0 %v1801
        %1905 = vmatpush1.bf16.msra.mxu0 %v1800
        %1906 = vmatprep.subr.bf16.mxu0 %v1805
        %1907 = vmatpush1.bf16.msra.mxu0 %v1804
        %1908 = vmatprep.subr.bf16.mxu0 %v1809
        %1909 = vmatpush1.bf16.msra.mxu0 %v1808
        %1910 = vmatprep.subr.bf16.mxu0 %v1813
        %1911 = vmatpush1.bf16.msra.mxu0 %v1812
        %1912 = vmatprep.subr.bf16.mxu0 %v1817
        %1913 = vmatpush1.bf16.msra.mxu0 %v1816
        %1914 = vmatprep.subr.bf16.mxu0 %v1821
        %1915 = vmatpush1.bf16.msra.mxu0 %v1820
        %1916 = vmatprep.subr.bf16.mxu0 %v1825
        %1917 = vmatpush1.bf16.msra.mxu0 %v1824
        %1918 = vmatprep.subr.bf16.mxu0 %v1829
        %1919 = vmatpush1.bf16.msra.mxu0 %v1828
        %1920 = vmatprep.subr.bf16.mxu0 %v1833
        %1921 = vmatpush1.bf16.msra.mxu0 %v1832
        %1922 = vmatprep.subr.bf16.mxu0 %v1837
        %1923 = vmatpush1.bf16.msra.mxu0 %v1836
        %1924 = vmatprep.subr.bf16.mxu0 0
        %1925 = vmatpush1.bf16.msra.mxu0 0
        %1926 = vmatprep.subr.bf16.mxu0 0
        %1927 = vmatpush1.bf16.msra.mxu0 0
        %1928 = vmatprep.subr.bf16.mxu0 0
        %1929 = vmatpush1.bf16.msra.mxu0 0
        %1930 = vmatprep.subr.bf16.mxu0 0
        %1931 = vmatpush1.bf16.msra.mxu0 0
        %1932 = vmatprep.subr.bf16.mxu0 0
        %1933 = vmatpush1.bf16.msra.mxu0 0
        %1934 = vmatprep.subr.bf16.mxu0 0
        %1935 = vmatpush1.bf16.msra.mxu0 0
        %1936 = vmatprep.mubr.bf16.mxu0 %v1881
        %1937 = vmatmul.mubr.bf16.gmra.mrb[0].mxu0 %v1640
        %v1938 = vpop.f32.mrb[0].mxu0
        %v1939 = vadd.f32 0.0, %v1938
        %v1940 = vpop.f32.mrb[0].mxu0
        %v1941 = vadd.f32 0.0, %v1940
        %v1942 = vpop.f32.mrb[0].mxu0
        %v1943 = vadd.f32 0.0, %v1942
        %v1944 = vpop.f32.mrb[0].mxu0
        %v1945 = vadd.f32 0.0, %v1944
        %1946 = vmatprep.mubr.bf16.mxu0 %v1884
        %1947 = vmatmul.mubr.bf16.gmra.mrb[0].mxu0 %v1645
        %v1948 = vpop.f32.mrb[0].mxu0
        %v1949 = vadd.f32 0.0, %v1948
        %v1950 = vpop.f32.mrb[0].mxu0
        %v1951 = vadd.f32 0.0, %v1950
        %v1952 = vpop.f32.mrb[0].mxu0
        %v1953 = vadd.f32 0.0, %v1952
        %v1954 = vpop.f32.mrb[0].mxu0
        %v1955 = vadd.f32 0.0, %v1954
        %1956 = vmatprep.mubr.bf16.mxu0 %v1887
        %1957 = vmatmul.mubr.bf16.gmra.mrb[0].mxu0 %v1649
        %v1958 = vpop.f32.mrb[0].mxu0
        %v1959 = vadd.f32 0.0, %v1958
        %v1960 = vpop.f32.mrb[0].mxu0
        %v1961 = vadd.f32 0.0, %v1960
        %v1962 = vpop.f32.mrb[0].mxu0
        %v1963 = vadd.f32 0.0, %v1962
        %v1964 = vpop.f32.mrb[0].mxu0
        %v1965 = vadd.f32 0.0, %v1964
        %1966 = vmatprep.mubr.bf16.mxu0 %v1890
        %1967 = vmatmul.mubr.bf16.gmra.mrb[0].mxu0 %v1653
        %v1968 = vpop.f32.mrb[0].mxu0
        %v1969 = vadd.f32 0.0, %v1968
        %v1970 = vpop.f32.mrb[0].mxu0
        %v1971 = vadd.f32 0.0, %v1970
        %v1972 = vpop.f32.mrb[0].mxu0
        %v1973 = vadd.f32 0.0, %v1972
        %v1974 = vpop.f32.mrb[0].mxu0
        %v1975 = vadd.f32 0.0, %v1974
        %1976 = vmatprep.mubr.bf16.mxu0 %v1893
        %1977 = vmatmul.mubr.bf16.gmra.mrb[0].mxu0 %v1657
        %v1978 = vpop.f32.mrb[0].mxu0
        %v1979 = vadd.f32 0.0, %v1978
        %v1980 = vpop.f32.mrb[0].mxu0
        %v1981 = vadd.f32 0.0, %v1980
        %v1982 = vpop.f32.mrb[0].mxu0
        %v1983 = vadd.f32 0.0, %v1982
        %v1984 = vpop.f32.mrb[0].mxu0
        %v1985 = vadd.f32 0.0, %v1984
        %1986 = vmatprep.mubr.bf16.mxu0 %v1896
        %1987 = vmatmul.mubr.bf16.gmra.mrb[0].mxu0 %v1661
        %v1988 = vpop.f32.mrb[0].mxu0
        %v1989 = vadd.f32 0.0, %v1988
        %v1990 = vpop.f32.mrb[0].mxu0
        %v1991 = vadd.f32 0.0, %v1990
        %v1992 = vpop.f32.mrb[0].mxu0
        %v1993 = vadd.f32 0.0, %v1992
        %v1994 = vpop.f32.mrb[0].mxu0
        %v1995 = vadd.f32 0.0, %v1994
        %1996 = vmatprep.mubr.bf16.mxu0 %v1899
        %1997 = vmatmul.mubr.bf16.gmra.mrb[0].mxu0 %v1665
        %v1998 = vpop.f32.mrb[0].mxu0
        %v1999 = vadd.f32 0.0, %v1998
        %v2000 = vpop.f32.mrb[0].mxu0
        %v2001 = vadd.f32 0.0, %v2000
        %v2002 = vpop.f32.mrb[0].mxu0
        %v2003 = vadd.f32 0.0, %v2002
        %v2004 = vpop.f32.mrb[0].mxu0
        %v2005 = vadd.f32 0.0, %v2004
        %2006 = vmatprep.mubr.bf16.mxu0 %v1902
        %2007 = vmatmul.mubr.bf16.gmra.mrb[0].mxu0 %v1669
        %v2008 = vpop.f32.mrb[0].mxu0
        %v2009 = vadd.f32 0.0, %v2008
        %v2010 = vpop.f32.mrb[0].mxu0
        %v2011 = vadd.f32 0.0, %v2010
        %v2012 = vpop.f32.mrb[0].mxu0
        %v2013 = vadd.f32 0.0, %v2012
        %v2014 = vpop.f32.mrb[0].mxu0
        %v2015 = vadd.f32 0.0, %v2014
        %2016 = vdwg.mxu0
        %2017 = vmatprep.subr.bf16.mxu0 %v1803
        %2018 = vmatpush1.bf16.msra.mxu0 %v1802
        %2019 = vmatprep.subr.bf16.mxu0 %v1807
        %2020 = vmatpush1.bf16.msra.mxu0 %v1806
        %2021 = vmatprep.subr.bf16.mxu0 %v1811
        %2022 = vmatpush1.bf16.msra.mxu0 %v1810
        %2023 = vmatprep.subr.bf16.mxu0 %v1815
        %2024 = vmatpush1.bf16.msra.mxu0 %v1814
        %2025 = vmatprep.subr.bf16.mxu0 %v1819
        %2026 = vmatpush1.bf16.msra.mxu0 %v1818
        %2027 = vmatprep.subr.bf16.mxu0 %v1823
        %2028 = vmatpush1.bf16.msra.mxu0 %v1822
        %2029 = vmatprep.subr.bf16.mxu0 %v1827
        %2030 = vmatpush1.bf16.msra.mxu0 %v1826
        %2031 = vmatprep.subr.bf16.mxu0 %v1831
        %2032 = vmatpush1.bf16.msra.mxu0 %v1830
        %2033 = vmatprep.subr.bf16.mxu0 %v1835
        %2034 = vmatpush1.bf16.msra.mxu0 %v1834
        %2035 = vmatprep.subr.bf16.mxu0 %v1839
        %2036 = vmatpush1.bf16.msra.mxu0 %v1838
        %2037 = vmatprep.subr.bf16.mxu0 0
        %2038 = vmatpush1.bf16.msra.mxu0 0
        %2039 = vmatprep.subr.bf16.mxu0 0
        %2040 = vmatpush1.bf16.msra.mxu0 0
        %2041 = vmatprep.subr.bf16.mxu0 0
        %2042 = vmatpush1.bf16.msra.mxu0 0
        %2043 = vmatprep.subr.bf16.mxu0 0
        %2044 = vmatpush1.bf16.msra.mxu0 0
        %2045 = vmatprep.subr.bf16.mxu0 0
        %2046 = vmatpush1.bf16.msra.mxu0 0
        %2047 = vmatprep.subr.bf16.mxu0 0
        %2048 = vmatpush1.bf16.msra.mxu0 0
        %2049 = vmatprep.mubr.bf16.mxu0 %v1881
        %2050 = vmatmul.mubr.bf16.gmra.mrb[0].mxu0 %v1640
        %v2051 = vpop.f32.mrb[0].mxu0
        %v2052 = vadd.f32 0.0, %v2051
        %v2053 = vpop.f32.mrb[0].mxu0
        %v2054 = vadd.f32 0.0, %v2053
        %v2055 = vpop.f32.mrb[0].mxu0
        %v2056 = vadd.f32 0.0, %v2055
        %v2057 = vpop.f32.mrb[0].mxu0
        %v2058 = vadd.f32 0.0, %v2057
        %2059 = vmatprep.mubr.bf16.mxu0 %v1884
        %2060 = vmatmul.mubr.bf16.gmra.mrb[0].mxu0 %v1645
        %v2061 = vpop.f32.mrb[0].mxu0
        %v2062 = vadd.f32 0.0, %v2061
        %v2063 = vpop.f32.mrb[0].mxu0
        %v2064 = vadd.f32 0.0, %v2063
        %v2065 = vpop.f32.mrb[0].mxu0
        %v2066 = vadd.f32 0.0, %v2065
        %v2067 = vpop.f32.mrb[0].mxu0
        %v2068 = vadd.f32 0.0, %v2067
        %2069 = vmatprep.mubr.bf16.mxu0 %v1887
        %2070 = vmatmul.mubr.bf16.gmra.mrb[0].mxu0 %v1649
        %v2071 = vpop.f32.mrb[0].mxu0
        %v2072 = vadd.f32 0.0, %v2071
        %v2073 = vpop.f32.mrb[0].mxu0
        %v2074 = vadd.f32 0.0, %v2073
        %v2075 = vpop.f32.mrb[0].mxu0
        %v2076 = vadd.f32 0.0, %v2075
        %v2077 = vpop.f32.mrb[0].mxu0
        %v2078 = vadd.f32 0.0, %v2077
        %2079 = vmatprep.mubr.bf16.mxu0 %v1890
        %2080 = vmatmul.mubr.bf16.gmra.mrb[0].mxu0 %v1653
        %v2081 = vpop.f32.mrb[0].mxu0
        %v2082 = vadd.f32 0.0, %v2081
        %v2083 = vpop.f32.mrb[0].mxu0
        %v2084 = vadd.f32 0.0, %v2083
        %v2085 = vpop.f32.mrb[0].mxu0
        %v2086 = vadd.f32 0.0, %v2085
        %v2087 = vpop.f32.mrb[0].mxu0
        %v2088 = vadd.f32 0.0, %v2087
        %2089 = vmatprep.mubr.bf16.mxu0 %v1893
        %2090 = vmatmul.mubr.bf16.gmra.mrb[0].mxu0 %v1657
        %v2091 = vpop.f32.mrb[0].mxu0
        %v2092 = vadd.f32 0.0, %v2091
        %v2093 = vpop.f32.mrb[0].mxu0
        %v2094 = vadd.f32 0.0, %v2093
        %v2095 = vpop.f32.mrb[0].mxu0
        %v2096 = vadd.f32 0.0, %v2095
        %v2097 = vpop.f32.mrb[0].mxu0
        %v2098 = vadd.f32 0.0, %v2097
        %2099 = vmatprep.mubr.bf16.mxu0 %v1896
        %2100 = vmatmul.mubr.bf16.gmra.mrb[0].mxu0 %v1661
        %v2101 = vpop.f32.mrb[0].mxu0
        %v2102 = vadd.f32 0.0, %v2101
        %v2103 = vpop.f32.mrb[0].mxu0
        %v2104 = vadd.f32 0.0, %v2103
        %v2105 = vpop.f32.mrb[0].mxu0
        %v2106 = vadd.f32 0.0, %v2105
        %v2107 = vpop.f32.mrb[0].mxu0
        %v2108 = vadd.f32 0.0, %v2107
        %2109 = vmatprep.mubr.bf16.mxu0 %v1899
        %2110 = vmatmul.mubr.bf16.gmra.mrb[0].mxu0 %v1665
        %v2111 = vpop.f32.mrb[0].mxu0
        %v2112 = vadd.f32 0.0, %v2111
        %v2113 = vpop.f32.mrb[0].mxu0
        %v2114 = vadd.f32 0.0, %v2113
        %v2115 = vpop.f32.mrb[0].mxu0
        %v2116 = vadd.f32 0.0, %v2115
        %v2117 = vpop.f32.mrb[0].mxu0
        %v2118 = vadd.f32 0.0, %v2117
        %2119 = vmatprep.mubr.bf16.mxu0 %v1902
        %2120 = vmatmul.mubr.bf16.gmra.mrb[0].mxu0 %v1669
        %v2121 = vpop.f32.mrb[0].mxu0
        %v2122 = vadd.f32 0.0, %v2121
        %v2123 = vpop.f32.mrb[0].mxu0
        %v2124 = vadd.f32 0.0, %v2123
        %v2125 = vpop.f32.mrb[0].mxu0
        %v2126 = vadd.f32 0.0, %v2125
        %v2127 = vpop.f32.mrb[0].mxu0
        %v2128 = vadd.f32 0.0, %v2127
        %2129 = vdwg.mxu0
        %v2130 = vadd.f32 %v1380, %v1939
        %v2131 = vadd.f32 %v1382, %v1941
        %v2132 = vadd.f32 %v1493, %v2052
        %v2133 = vadd.f32 %v1495, %v2054
        %v2134 = vadd.f32 %v1384, %v1943
        %v2135 = vadd.f32 %v1386, %v1945
        %v2136 = vadd.f32 %v1497, %v2056
        %v2137 = vadd.f32 %v1499, %v2058
        %v2138 = vadd.f32 %v1390, %v1949
        %v2139 = vadd.f32 %v1392, %v1951
        %v2140 = vadd.f32 %v1503, %v2062
        %v2141 = vadd.f32 %v1505, %v2064
        %v2142 = vadd.f32 %v1394, %v1953
        %v2143 = vadd.f32 %v1396, %v1955
        %v2144 = vadd.f32 %v1507, %v2066
        %v2145 = vadd.f32 %v1509, %v2068
        %v2146 = vadd.f32 %v1400, %v1959
        %v2147 = vadd.f32 %v1402, %v1961
        %v2148 = vadd.f32 %v1513, %v2072
        %v2149 = vadd.f32 %v1515, %v2074
        %v2150 = vadd.f32 %v1404, %v1963
        %v2151 = vadd.f32 %v1406, %v1965
        %v2152 = vadd.f32 %v1517, %v2076
        %v2153 = vadd.f32 %v1519, %v2078
        %v2154 = vadd.f32 %v1410, %v1969
        %v2155 = vadd.f32 %v1412, %v1971
        %v2156 = vadd.f32 %v1523, %v2082
        %v2157 = vadd.f32 %v1525, %v2084
        %v2158 = vadd.f32 %v1414, %v1973
        %v2159 = vadd.f32 %v1416, %v1975
        %v2160 = vadd.f32 %v1527, %v2086
        %v2161 = vadd.f32 %v1529, %v2088
        %v2162 = vadd.f32 %v1420, %v1979
        %v2163 = vadd.f32 %v1422, %v1981
        %v2164 = vadd.f32 %v1533, %v2092
        %v2165 = vadd.f32 %v1535, %v2094
        %v2166 = vadd.f32 %v1424, %v1983
        %v2167 = vadd.f32 %v1426, %v1985
        %v2168 = vadd.f32 %v1537, %v2096
        %v2169 = vadd.f32 %v1539, %v2098
        %v2170 = vadd.f32 %v1430, %v1989
        %v2171 = vadd.f32 %v1432, %v1991
        %v2172 = vadd.f32 %v1543, %v2102
        %v2173 = vadd.f32 %v1545, %v2104
        %v2174 = vadd.f32 %v1434, %v1993
        %v2175 = vadd.f32 %v1436, %v1995
        %v2176 = vadd.f32 %v1547, %v2106
        %v2177 = vadd.f32 %v1549, %v2108
        %v2178 = vadd.f32 %v1440, %v1999
        %v2179 = vadd.f32 %v1442, %v2001
        %v2180 = vadd.f32 %v1553, %v2112
        %v2181 = vadd.f32 %v1555, %v2114
        %v2182 = vadd.f32 %v1444, %v2003
        %v2183 = vadd.f32 %v1446, %v2005
        %v2184 = vadd.f32 %v1557, %v2116
        %v2185 = vadd.f32 %v1559, %v2118
        %v2186 = vadd.f32 %v1450, %v2009
        %v2187 = vadd.f32 %v1452, %v2011
        %v2188 = vadd.f32 %v1563, %v2122
        %v2189 = vadd.f32 %v1565, %v2124
        %v2190 = vadd.f32 %v1454, %v2013
        %v2191 = vadd.f32 %v1456, %v2015
        %v2192 = vadd.f32 %v1567, %v2126
        %v2193 = vadd.f32 %v1569, %v2128
        %v2194 = vmul.f32 %v2130, %v2130
        %v2195 = vmul.f32 %v2131, %v2131
        %v2196 = vmul.f32 %v2134, %v2134
        %v2197 = vmul.f32 %v2135, %v2135
        %v2198 = vmul.f32 %v2138, %v2138
        %v2199 = vmul.f32 %v2139, %v2139
        %v2200 = vmul.f32 %v2142, %v2142
        %v2201 = vmul.f32 %v2143, %v2143
        %v2202 = vmul.f32 %v2146, %v2146
        %v2203 = vmul.f32 %v2147, %v2147
        %v2204 = vmul.f32 %v2150, %v2150
        %v2205 = vmul.f32 %v2151, %v2151
        %v2206 = vmul.f32 %v2154, %v2154
        %v2207 = vmul.f32 %v2155, %v2155
        %v2208 = vmul.f32 %v2158, %v2158
        %v2209 = vmul.f32 %v2159, %v2159
        %v2210 = vmul.f32 %v2162, %v2162
        %v2211 = vmul.f32 %v2163, %v2163
        %v2212 = vmul.f32 %v2166, %v2166
        %v2213 = vmul.f32 %v2167, %v2167
        %v2214 = vmul.f32 %v2170, %v2170
        %v2215 = vmul.f32 %v2171, %v2171
        %v2216 = vmul.f32 %v2174, %v2174
        %v2217 = vmul.f32 %v2175, %v2175
        %v2218 = vmul.f32 %v2178, %v2178
        %v2219 = vmul.f32 %v2179, %v2179
        %v2220 = vmul.f32 %v2182, %v2182
        %v2221 = vmul.f32 %v2183, %v2183
        %v2222 = vmul.f32 %v2186, %v2186
        %v2223 = vmul.f32 %v2187, %v2187
        %v2224 = vmul.f32 %v2190, %v2190
        %v2225 = vmul.f32 %v2191, %v2191
        %v2226 = vmul.f32 %v2132, %v2132
        %v2227 = vmul.f32 %v2133, %v2133
        %v2228 = vmul.f32 %v2136, %v2136
        %v2229 = vmul.f32 %v2137, %v2137
        %v2230 = vmul.f32 %v2140, %v2140
        %v2231 = vmul.f32 %v2141, %v2141
        %v2232 = vmul.f32 %v2144, %v2144
        %v2233 = vmul.f32 %v2145, %v2145
        %v2234 = vmul.f32 %v2148, %v2148
        %v2235 = vmul.f32 %v2149, %v2149
        %v2236 = vmul.f32 %v2152, %v2152
        %v2237 = vmul.f32 %v2153, %v2153
        %v2238 = vmul.f32 %v2156, %v2156
        %v2239 = vmul.f32 %v2157, %v2157
        %v2240 = vmul.f32 %v2160, %v2160
        %v2241 = vmul.f32 %v2161, %v2161
        %v2242 = vmul.f32 %v2164, %v2164
        %v2243 = vmul.f32 %v2165, %v2165
        %v2244 = vmul.f32 %v2168, %v2168
        %v2245 = vmul.f32 %v2169, %v2169
        %v2246 = vmul.f32 %v2172, %v2172
        %v2247 = vmul.f32 %v2173, %v2173
        %v2248 = vmul.f32 %v2176, %v2176
        %v2249 = vmul.f32 %v2177, %v2177
        %v2250 = vmul.f32 %v2180, %v2180
        %v2251 = vmul.f32 %v2181, %v2181
        %v2252 = vmul.f32 %v2184, %v2184
        %v2253 = vmul.f32 %v2185, %v2185
        %v2254 = vmul.f32 %v2188, %v2188
        %v2255 = vmul.f32 %v2189, %v2189
        %v2256 = vmul.f32 %v2192, %v2192
        %v2257 = vmul.f32 %v2193, %v2193
        %v2258 = vadd.f32 %v2194, %v2226
        %v2259 = vadd.f32 %v2195, %v2227
        %v2260 = vadd.f32 %v2196, %v2228
        %v2261 = vadd.f32 %v2197, %v2229
        %v2262 = vadd.f32 %v2198, %v2230
        %v2263 = vadd.f32 %v2199, %v2231
        %v2264 = vadd.f32 %v2200, %v2232
        %v2265 = vadd.f32 %v2201, %v2233
        %v2266 = vadd.f32 %v2202, %v2234
        %v2267 = vadd.f32 %v2203, %v2235
        %v2268 = vadd.f32 %v2204, %v2236
        %v2269 = vadd.f32 %v2205, %v2237
        %v2270 = vadd.f32 %v2206, %v2238
        %v2271 = vadd.f32 %v2207, %v2239
        %v2272 = vadd.f32 %v2208, %v2240
        %v2273 = vadd.f32 %v2209, %v2241
        %v2274 = vadd.f32 %v2210, %v2242
        %v2275 = vadd.f32 %v2211, %v2243
        %v2276 = vadd.f32 %v2212, %v2244
        %v2277 = vadd.f32 %v2213, %v2245
        %v2278 = vadd.f32 %v2214, %v2246
        %v2279 = vadd.f32 %v2215, %v2247
        %v2280 = vadd.f32 %v2216, %v2248
        %v2281 = vadd.f32 %v2217, %v2249
        %v2282 = vadd.f32 %v2218, %v2250
        %v2283 = vadd.f32 %v2219, %v2251
        %v2284 = vadd.f32 %v2220, %v2252
        %v2285 = vadd.f32 %v2221, %v2253
        %v2286 = vadd.f32 %v2222, %v2254
        %v2287 = vadd.f32 %v2223, %v2255
        %v2288 = vadd.f32 %v2224, %v2256
        %v2289 = vadd.f32 %v2225, %v2257
        %v2290 = vld [vmem:[#allocation9] sm:$0xff]
        %v2291 = vld [vmem:[#allocation9 + $0x8] sm:$0xff]
        %v2292 = vld [vmem:[#allocation9 + $0x10] sm:$0xff]
        %v2293 = vld [vmem:[#allocation9 + $0x18] sm:$0xff]
        %v2294 = vld [vmem:[#allocation9 + $0x20] sm:$0xff]
        %v2295 = vld [vmem:[#allocation9 + $0x28] sm:$0xff]
        %v2296 = vld [vmem:[#allocation9 + $0x30] sm:$0xff]
        %v2297 = vld [vmem:[#allocation9 + $0x38] sm:$0xff]
        %v2298 = vld [vmem:[#allocation9 + $0x40] sm:$0xff]
        %v2299 = vld [vmem:[#allocation9 + $0x48] sm:$0xff]
        %v2300 = vld [vmem:[#allocation9 + $0x50] sm:$0xff]
        %v2301 = vld [vmem:[#allocation9 + $0x58] sm:$0xff]
        %v2302 = vld [vmem:[#allocation9 + $0x60] sm:$0xff]
        %v2303 = vld [vmem:[#allocation9 + $0x68] sm:$0xff]
        %v2304 = vld [vmem:[#allocation9 + $0x70] sm:$0xff]
        %v2305 = vld [vmem:[#allocation9 + $0x78] sm:$0xff]
        %v2306 = vld [vmem:[#allocation9 + $0x80] sm:$0xff]
        %v2307 = vld [vmem:[#allocation9 + $0x88] sm:$0xff]
        %v2308 = vld [vmem:[#allocation9 + $0x90] sm:$0xff]
        %v2309 = vld [vmem:[#allocation9 + $0x98] sm:$0xff]
        %v2310 = vld [vmem:[#allocation9 + $0xa0] sm:$0xff]
        %v2311 = vld [vmem:[#allocation9 + $0xa8] sm:$0xff]
        %v2312 = vld [vmem:[#allocation9 + $0xb0] sm:$0xff]
        %v2313 = vld [vmem:[#allocation9 + $0xb8] sm:$0xff]
        %v2314 = vld [vmem:[#allocation9 + $0xc0] sm:$0xff]
        %v2315 = vld [vmem:[#allocation9 + $0xc8] sm:$0xff]
        %v2316 = vld [vmem:[#allocation9 + $0xd0] sm:$0xff]
        %v2317 = vld [vmem:[#allocation9 + $0xd8] sm:$0xff]
        %v2318 = vld [vmem:[#allocation9 + $0xe0] sm:$0xff]
        %v2319 = vld [vmem:[#allocation9 + $0xe8] sm:$0xff]
        %v2320 = vld [vmem:[#allocation9 + $0xf0] sm:$0xff]
        %v2321 = vld [vmem:[#allocation9 + $0xf8] sm:$0xff]
        %2322 = vmatprep.subr.mxu0 0.0
        %2323 = vmatpush1.msra.mxu0 %v2290
        %2324 = vmatprep.subr.mxu0 0.0
        %2325 = vmatpush1.msra.mxu0 %v2291
        %2326 = vmatprep.subr.mxu0 0.0
        %2327 = vmatpush1.msra.mxu0 %v2292
        %2328 = vmatprep.subr.mxu0 0.0
        %2329 = vmatpush1.msra.mxu0 %v2293
        %2330 = vmatprep.subr.mxu0 0.0
        %2331 = vmatpush1.msra.mxu0 %v2294
        %2332 = vmatprep.subr.mxu0 0.0
        %2333 = vmatpush1.msra.mxu0 %v2295
        %2334 = vmatprep.subr.mxu0 0.0
        %2335 = vmatpush1.msra.mxu0 %v2296
        %2336 = vmatprep.subr.mxu0 0.0
        %2337 = vmatpush1.msra.mxu0 %v2297
        %2338 = vmatprep.subr.mxu0 0.0
        %2339 = vmatpush1.msra.mxu0 %v2298
        %2340 = vmatprep.subr.mxu0 0.0
        %2341 = vmatpush1.msra.mxu0 %v2299
        %2342 = vmatprep.subr.mxu0 0.0
        %2343 = vmatpush1.msra.mxu0 %v2300
        %2344 = vmatprep.subr.mxu0 0.0
        %2345 = vmatpush1.msra.mxu0 %v2301
        %2346 = vmatprep.subr.mxu0 0.0
        %2347 = vmatpush1.msra.mxu0 %v2302
        %2348 = vmatprep.subr.mxu0 0.0
        %2349 = vmatpush1.msra.mxu0 %v2303
        %2350 = vmatprep.subr.mxu0 0.0
        %2351 = vmatpush1.msra.mxu0 %v2304
        %2352 = vmatprep.subr.mxu0 0.0
        %2353 = vmatpush1.msra.mxu0 %v2305
        %2354 = vmatprep.subr.mxu0 0.0
        %2355 = vmatpush1.msra.mxu0 %v2306
        %2356 = vmatprep.subr.mxu0 0.0
        %2357 = vmatpush1.msra.mxu0 %v2307
        %2358 = vmatprep.subr.mxu0 0.0
        %2359 = vmatpush1.msra.mxu0 %v2308
        %2360 = vmatprep.subr.mxu0 0.0
        %2361 = vmatpush1.msra.mxu0 %v2309
        %2362 = vmatprep.subr.mxu0 0.0
        %2363 = vmatpush1.msra.mxu0 %v2310
        %2364 = vmatprep.subr.mxu0 0.0
        %2365 = vmatpush1.msra.mxu0 %v2311
        %2366 = vmatprep.subr.mxu0 0.0
        %2367 = vmatpush1.msra.mxu0 %v2312
        %2368 = vmatprep.subr.mxu0 0.0
        %2369 = vmatpush1.msra.mxu0 %v2313
        %2370 = vmatprep.subr.mxu0 0.0
        %2371 = vmatpush1.msra.mxu0 %v2314
        %2372 = vmatprep.subr.mxu0 0.0
        %2373 = vmatpush1.msra.mxu0 %v2315
        %2374 = vmatprep.subr.mxu0 0.0
        %2375 = vmatpush1.msra.mxu0 %v2316
        %2376 = vmatprep.subr.mxu0 0.0
        %2377 = vmatpush1.msra.mxu0 %v2317
        %2378 = vmatprep.subr.mxu0 0.0
        %2379 = vmatpush1.msra.mxu0 %v2318
        %2380 = vmatprep.subr.mxu0 0.0
        %2381 = vmatpush1.msra.mxu0 %v2319
        %2382 = vmatprep.subr.mxu0 0.0
        %2383 = vmatpush1.msra.mxu0 %v2320
        %2384 = vmatprep.subr.mxu0 0.0
        %2385 = vmatpush1.msra.mxu0 %v2321
        %2386 = vmatprep.mubr.f32.mxu0 %v2259
        %2387 = vmatmul.mubr.f32.gmra.mrb[0].mxu0 %v2258
        %v2388 = vpop.f32.mrb[0].mxu0
        %v2389 = vadd.f32 1e-08, %v2388
        %v2390 = vpop.f32.mrb[0].mxu0
        %2391 = vmatprep.mubr.f32.mxu0 %v2261
        %2392 = vmatmul.mubr.f32.gmra.mrb[0].mxu0 %v2260
        %v2393 = vpop.f32.mrb[0].mxu0
        %v2394 = vadd.f32 1e-08, %v2393
        %v2395 = vpop.f32.mrb[0].mxu0
        %2396 = vmatprep.mubr.f32.mxu0 %v2263
        %2397 = vmatmul.mubr.f32.gmra.mrb[0].mxu0 %v2262
        %v2398 = vpop.f32.mrb[0].mxu0
        %v2399 = vadd.f32 1e-08, %v2398
        %v2400 = vpop.f32.mrb[0].mxu0
        %2401 = vmatprep.mubr.f32.mxu0 %v2265
        %2402 = vmatmul.mubr.f32.gmra.mrb[0].mxu0 %v2264
        %v2403 = vpop.f32.mrb[0].mxu0
        %v2404 = vadd.f32 1e-08, %v2403
        %v2405 = vpop.f32.mrb[0].mxu0
        %2406 = vmatprep.mubr.f32.mxu0 %v2267
        %2407 = vmatmul.mubr.f32.gmra.mrb[0].mxu0 %v2266
        %v2408 = vpop.f32.mrb[0].mxu0
        %v2409 = vadd.f32 1e-08, %v2408
        %v2410 = vpop.f32.mrb[0].mxu0
        %2411 = vmatprep.mubr.f32.mxu0 %v2269
        %2412 = vmatmul.mubr.f32.gmra.mrb[0].mxu0 %v2268
        %v2413 = vpop.f32.mrb[0].mxu0
        %v2414 = vadd.f32 1e-08, %v2413
        %v2415 = vpop.f32.mrb[0].mxu0
        %2416 = vmatprep.mubr.f32.mxu0 %v2271
        %2417 = vmatmul.mubr.f32.gmra.mrb[0].mxu0 %v2270
        %v2418 = vpop.f32.mrb[0].mxu0
        %v2419 = vadd.f32 1e-08, %v2418
        %v2420 = vpop.f32.mrb[0].mxu0
        %2421 = vmatprep.mubr.f32.mxu0 %v2273
        %2422 = vmatmul.mubr.f32.gmra.mrb[0].mxu0 %v2272
        %v2423 = vpop.f32.mrb[0].mxu0
        %v2424 = vadd.f32 1e-08, %v2423
        %v2425 = vpop.f32.mrb[0].mxu0
        %2426 = vmatprep.mubr.f32.mxu0 %v2275
        %2427 = vmatmul.mubr.f32.gmra.mrb[0].mxu0 %v2274
        %v2428 = vpop.f32.mrb[0].mxu0
        %v2429 = vadd.f32 1e-08, %v2428
        %v2430 = vpop.f32.mrb[0].mxu0
        %2431 = vmatprep.mubr.f32.mxu0 %v2277
        %2432 = vmatmul.mubr.f32.gmra.mrb[0].mxu0 %v2276
        %v2433 = vpop.f32.mrb[0].mxu0
        %v2434 = vadd.f32 1e-08, %v2433
        %v2435 = vpop.f32.mrb[0].mxu0
        %2436 = vmatprep.mubr.f32.mxu0 %v2279
        %2437 = vmatmul.mubr.f32.gmra.mrb[0].mxu0 %v2278
        %v2438 = vpop.f32.mrb[0].mxu0
        %v2439 = vadd.f32 1e-08, %v2438
        %v2440 = vpop.f32.mrb[0].mxu0
        %2441 = vmatprep.mubr.f32.mxu0 %v2281
        %2442 = vmatmul.mubr.f32.gmra.mrb[0].mxu0 %v2280
        %v2443 = vpop.f32.mrb[0].mxu0
        %v2444 = vadd.f32 1e-08, %v2443
        %v2445 = vpop.f32.mrb[0].mxu0
        %2446 = vmatprep.mubr.f32.mxu0 %v2283
        %2447 = vmatmul.mubr.f32.gmra.mrb[0].mxu0 %v2282
        %v2448 = vpop.f32.mrb[0].mxu0
        %v2449 = vadd.f32 1e-08, %v2448
        %v2450 = vpop.f32.mrb[0].mxu0
        %2451 = vmatprep.mubr.f32.mxu0 %v2285
        %2452 = vmatmul.mubr.f32.gmra.mrb[0].mxu0 %v2284
        %v2453 = vpop.f32.mrb[0].mxu0
        %v2454 = vadd.f32 1e-08, %v2453
        %v2455 = vpop.f32.mrb[0].mxu0
        %2456 = vmatprep.mubr.f32.mxu0 %v2287
        %2457 = vmatmul.mubr.f32.gmra.mrb[0].mxu0 %v2286
        %v2458 = vpop.f32.mrb[0].mxu0
        %v2459 = vadd.f32 1e-08, %v2458
        %v2460 = vpop.f32.mrb[0].mxu0
        %2461 = vmatprep.mubr.f32.mxu0 %v2289
        %2462 = vmatmul.mubr.f32.gmra.mrb[0].mxu0 %v2288
        %v2463 = vpop.f32.mrb[0].mxu0
        %v2464 = vadd.f32 1e-08, %v2463
        %v2465 = vpop.f32.mrb[0].mxu0
        %2466 = vdwg.mxu0
        %v2467 = vlog2.pop %v2389
        %v2468 = vmul.f32 %v2467, 0.6931472
        %v2469 = vlog2.pop %v2394
        %v2470 = vmul.f32 %v2469, 0.6931472
        %v2471 = vlog2.pop %v2399
        %v2472 = vmul.f32 %v2471, 0.6931472
        %v2473 = vlog2.pop %v2404
        %v2474 = vmul.f32 %v2473, 0.6931472
        %v2475 = vlog2.pop %v2409
        %v2476 = vmul.f32 %v2475, 0.6931472
        %v2477 = vlog2.pop %v2414
        %v2478 = vmul.f32 %v2477, 0.6931472
        %v2479 = vlog2.pop %v2419
        %v2480 = vmul.f32 %v2479, 0.6931472
        %v2481 = vlog2.pop %v2424
        %v2482 = vmul.f32 %v2481, 0.6931472
        %v2483 = vlog2.pop %v2429
        %v2484 = vmul.f32 %v2483, 0.6931472
        %v2485 = vlog2.pop %v2434
        %v2486 = vmul.f32 %v2485, 0.6931472
        %v2487 = vlog2.pop %v2439
        %v2488 = vmul.f32 %v2487, 0.6931472
        %v2489 = vlog2.pop %v2444
        %v2490 = vmul.f32 %v2489, 0.6931472
        %v2491 = vlog2.pop %v2449
        %v2492 = vmul.f32 %v2491, 0.6931472
        %v2493 = vlog2.pop %v2454
        %v2494 = vmul.f32 %v2493, 0.6931472
        %v2495 = vlog2.pop %v2459
        %v2496 = vmul.f32 %v2495, 0.6931472
        %v2497 = vlog2.pop %v2464
        %v2498 = vmul.f32 %v2497, 0.6931472
        %2499 = vxpose.xlu0.b32.start [1/16] %v2468, 128
        %2500 = vxpose.xlu0.b32.cont [2/16] %v2470, 128
        %2501 = vxpose.xlu0.b32.cont [3/16] %v2472, 128
        %2502 = vxpose.xlu0.b32.cont [4/16] %v2474, 128
        %2503 = vxpose.xlu0.b32.cont [5/16] %v2476, 128
        %2504 = vxpose.xlu0.b32.cont [6/16] %v2478, 128
        %2505 = vxpose.xlu0.b32.cont [7/16] %v2480, 128
        %2506 = vxpose.xlu0.b32.cont [8/16] %v2482, 128
        %2507 = vxpose.xlu0.b32.cont [9/16] %v2484, 128
        %2508 = vxpose.xlu0.b32.cont [10/16] %v2486, 128
        %2509 = vxpose.xlu0.b32.cont [11/16] %v2488, 128
        %2510 = vxpose.xlu0.b32.cont [12/16] %v2490, 128
        %2511 = vxpose.xlu0.b32.cont [13/16] %v2492, 128
        %2512 = vxpose.xlu0.b32.cont [14/16] %v2494, 128
        %2513 = vxpose.xlu0.b32.cont [15/16] %v2496, 128
        %2514 = vxpose.xlu0.b32.end [16/16] %v2498, 128
        %v2515 = vpop.trf.xlu0
        %v2516 = vpop.trf.xlu0
        %v2517 = vpop.trf.xlu0
        %v2518 = vpop.trf.xlu0
        %v2519 = vpop.trf.xlu0
        %v2520 = vpop.trf.xlu0
        %v2521 = vpop.trf.xlu0
        %v2522 = vpop.trf.xlu0
        %v2523 = vpop.trf.xlu0
        %v2524 = vpop.trf.xlu0
        %v2525 = vpop.trf.xlu0
        %v2526 = vpop.trf.xlu0
        %v2527 = vpop.trf.xlu0
        %v2528 = vpop.trf.xlu0
        %v2529 = vpop.trf.xlu0
        %v2530 = vpop.trf.xlu0
        %2531 = vst [vmem:[%s318] sm:$0xff] %v2515
        %2532 = vst [vmem:[%s318 + $0x8] sm:$0xff] %v2516
        %2533 = vst [vmem:[%s318 + $0x10] sm:$0xff] %v2517
        %2534 = vst [vmem:[%s318 + $0x18] sm:$0xff] %v2518
        %2535 = vst [vmem:[%s318 + $0x20] sm:$0xff] %v2519
        %2536 = vst [vmem:[%s318 + $0x28] sm:$0xff] %v2520
        %2537 = vst [vmem:[%s318 + $0x30] sm:$0xff] %v2521
        %2538 = vst [vmem:[%s318 + $0x38] sm:$0xff] %v2522
        %s2539 = sand.u32 %s149, 1
        %s2540 = scalar_lea.sflag [#allocation5], %s2539
        %s2541 = sand.u32 %s149, 1
        %s2542 = smul.addr %s2541, 64
        %s2543 = scalar_lea.vmem [#allocation11], %s2542
        // Predicated region
        $region53: #{tpu_custom_call.1} parent=35 // pred_check
          %p2544 = pneg %p159
        $region54: #{tpu_custom_call.1} parent=35 // pred_check_branch
          %2546 = sbr.rel (%p2544) target = $region56
        $region55: #{tpu_custom_call.1} parent=35 // pred_region
          %s2548 = ssub.s32 1024, 1024
          %2549 = vsyncadd %s2540, %s2548
          %s2550 = smul.addr %s29, 8
          %s2551 = sadd.s32 %s30, %s2550
          %s2552 = smul.addr %s2551, 128
          %s2553 = scalar_lea.hbm %s4, %s2552
          %s2554 = sshll.u32 %s2543, 4
          %s2555 = int_to_ptr.vmem [resolvable:$true] %s2554
          %2560 = dma.vmem_to_hbm [thread:$0]  %s2555, 1024, %s2553, %s2540, 128, 128, 8
        $region56: #{tpu_custom_call.1} parent=35 // pred_fallthru
          _
      $region36: #{tpu_custom_call.1} parent=5 // pred_fallthru
        _
      %p2561 = scmp.le.s32.totalorder 2, %s20
      // Predicated region
      $region57: #{tpu_custom_call.1} parent=5 // pred_check
        %p2562 = pneg %p2561
      $region58: #{tpu_custom_call.1} parent=5 // pred_check_branch
        %2564 = sbr.rel (%p2562) target = $region60
      $region59: #{tpu_custom_call.1} parent=5 // pred_region
        %s2565 = ssub.s32 %s20, 2
        // Predicated region
        $region61: #{tpu_custom_call.1} parent=59 // pred_check
          %p2566 = pneg %p165
        $region62: #{tpu_custom_call.1} parent=59 // pred_check_branch
          %2568 = sbr.rel (%p2566) target = $region64
        $region63: #{tpu_custom_call.1} parent=59 // pred_region
          %s2569 = sand.u32 %s150, 1
          %s2570 = scalar_lea.sflag [#allocation5], %s2569
          %s2571 = sand.u32 %s150, 1
          %s2572 = smul.addr %s2571, 64
          %s2573 = scalar_lea.vmem [#allocation11], %s2572
          %2574 = dma.done %s2570, 1024
        $region64: #{tpu_custom_call.1} parent=59 // pred_fallthru
          _
      $region60: #{tpu_custom_call.1} parent=5 // pred_fallthru
        _
    $region6: #{tpu_custom_call.1} parent=1 // loop_footer
      %s24 = sadd.s32 1, %s20
    $region7: #{tpu_custom_call.1} parent=1 // loop_footer_branch
      %19 = sbr.rel target = $region3
    $region8: #{tpu_custom_call.1} parent=1 // loop_exit
      _
    %2575 = vsyncpa [#allocation4], 1
    %s2576 = scalar_lea.sflag [#allocation4], 1
    %2577 = vsyncpa %s2576, 1
    %2578 = vsyncpa [#allocation7], 1
    %s2579 = scalar_lea.sflag [#allocation7], 1
    %2580 = vsyncpa %s2579, 1
    %2581 = vsyncpa [#allocation10], 1
    %2582 = vsyncpa [#allocation5], 1
    %s2583 = scalar_lea.sflag [#allocation5], 1
    %2584 = vsyncpa %s2583, 1

</llo_original>
